<compile_context>
chip_gen: v6e
topology: v6e:2x2x1
jax: 0.10.0
libtpu: 0.0.40
codegen_flags: <defaults>
</compile_context>

<pallas_src>
import functools

import jax
import jax.numpy as jnp
from jax.experimental import pallas as pl
from jax.experimental.pallas import tpu as pltpu


def _ldecoder_kernel(x_ref, h0_ref, c0_ref, wih_ref, whh_ref, b_ref,
                     wout_ref, bout_ref, y_ref, gx_scr, hs_scr,
                     *, seq_len, batch, hidden):
    T, B, H = seq_len, batch, hidden

    # ---- Prologue: input projection for ALL timesteps, hoisted out of the
    # recurrence. One full-width (T*B, D_in) @ (D_in, 4H) matmul; the fused
    # bias (b_ih + b_hh) is folded in here as a single (1, 4H) broadcast add.
    gx_scr[...] = (jnp.dot(x_ref[...], wih_ref[...],
                           preferred_element_type=jnp.float32)
                   + b_ref[...])                              # (T*B, 4H)

    # Hoist the fused recurrent weight out of the loop (read once).
    w_hh = whh_ref[...]                                       # (H, 4H)

    def step(t, carry):
        h, c = carry
        off = pl.multiple_of(t * B, B)
        # One full-width recurrent matmul per step: (B, H) @ (H, 4H) = (B, 4H).
        pre = gx_scr[pl.ds(off, B), :] + jnp.dot(
            h, w_hh, preferred_element_type=jnp.float32)      # (B, 4H)

        # Two EUP passes on the full (B, 4H) vreg; gates are static 32-lane
        # slices of the results.  Gate order (PyTorch): i, f, g, o.
        sig = jax.nn.sigmoid(pre)
        tnh = jnp.tanh(pre)
        i_g = sig[:, 0 * H:1 * H]
        f_g = sig[:, 1 * H:2 * H]
        g_g = tnh[:, 2 * H:3 * H]
        o_g = sig[:, 3 * H:4 * H]

        c_new = f_g * c + i_g * g_g
        h_new = o_g * jnp.tanh(c_new)

        hs_scr[pl.ds(off, B), :] = h_new
        return h_new, c_new

    h0 = h0_ref[...].astype(jnp.float32)
    c0 = c0_ref[...].astype(jnp.float32)
    # Fully unrolled so the LLO scheduler sees the whole recurrence.
    jax.lax.fori_loop(0, T, step, (h0, c0), unroll=True)

    # ---- Epilogue: lane-dense output head (padded to 128 output lanes) as
    # one matmul over all timesteps + one unmasked full-width store.
    y = (jnp.dot(hs_scr[...], wout_ref[...],
                 preferred_element_type=jnp.float32)
         + bout_ref[...])                                     # (T*B, O_pad)
    y_ref[...] = y.astype(y_ref.dtype)


def ldecoder_forward(inputs, h0, c0, w_ih, w_hh, b_ih, b_hh, w_label, b_label):
    """inputs: (T, B, D_in); returns (T, B, output_size)."""
    T, B, D_in = inputs.shape
    H = h0.shape[-1]
    O = w_label.shape[0]
    O_PAD = 128  # lane-dense output head; sliced back to O in the wrapper.

    # Flatten time*batch in the wrapper (free for XLA), so the kernel works on
    # a contiguous (T*B, D_in) slab with no in-kernel reshape.
    x_flat = inputs.reshape(T * B, D_in)

    # Lane-concatenated gate layout: gates along the 128-lane (last) axis.
    # PyTorch packs W_* as (4H, in) with gate blocks [i; f; g; o] along rows,
    # so a plain transpose gives column blocks [i | f | g | o].
    wih_cat = jnp.asarray(w_ih, jnp.float32).T                 # (D_in, 4H)
    whh_cat = jnp.asarray(w_hh, jnp.float32).T                 # (H, 4H)
    bias_cat = (jnp.asarray(b_ih, jnp.float32)
                + jnp.asarray(b_hh, jnp.float32)).reshape(1, 4 * H)  # (1, 4H)

    # Lane-dense (zero-padded) output head.
    wout_pad = jnp.zeros((H, O_PAD), jnp.float32).at[:, :O].set(
        jnp.asarray(w_label, jnp.float32).T)                   # (H, 128)
    bout_pad = jnp.zeros((1, O_PAD), jnp.float32).at[:, :O].set(
        jnp.asarray(b_label, jnp.float32).reshape(1, O))       # (1, 128)

    kernel = functools.partial(_ldecoder_kernel, seq_len=T, batch=B, hidden=H)

    y_flat = pl.pallas_call(
        kernel,
        out_shape=jax.ShapeDtypeStruct((T * B, O_PAD), inputs.dtype),
        grid_spec=pltpu.PrefetchScalarGridSpec(
            num_scalar_prefetch=0,
            grid=(1,),
            in_specs=[
                pl.BlockSpec((T * B, D_in), lambda i: (0, 0)),   # x (flattened)
                pl.BlockSpec((B, H), lambda i: (0, 0)),          # h0
                pl.BlockSpec((B, H), lambda i: (0, 0)),          # c0
                pl.BlockSpec((D_in, 4 * H), lambda i: (0, 0)),   # W_ih^T, gates on lanes
                pl.BlockSpec((H, 4 * H), lambda i: (0, 0)),      # W_hh^T, gates on lanes
                pl.BlockSpec((1, 4 * H), lambda i: (0, 0)),      # fused bias
                pl.BlockSpec((H, O_PAD), lambda i: (0, 0)),      # W_label^T (padded)
                pl.BlockSpec((1, O_PAD), lambda i: (0, 0)),      # b_label (padded)
            ],
            out_specs=pl.BlockSpec((T * B, O_PAD), lambda i: (0, 0)),
            scratch_shapes=[
                pltpu.VMEM((T * B, 4 * H), jnp.float32),  # gates_x (input proj.)
                pltpu.VMEM((T * B, H), jnp.float32),      # all h_t
            ],
        ),
        compiler_params=pltpu.CompilerParams(
            dimension_semantics=("arbitrary",),
            # Explicit scoped-VMEM limit so the kernel keeps working when H/T
            # scale (v7x default scoped limit is 32 MiB, physical 64 MiB/TC).
            vmem_limit_bytes=32 * 1024 * 1024),
    )(x_flat, h0, c0, wih_cat, whh_cat, bias_cat, wout_pad, bout_pad)

    return y_flat[:, :O].reshape(T, B, O)


def _reference_forward(inputs, h0, c0, w_ih, w_hh, b_ih, b_hh, w_label, b_label):
    """Pure-JAX reference (lax.scan) matching PyTorch nn.LSTM semantics."""
    H = h0.shape[-1]

    def step(carry, x_t):
        h, c = carry
        gates = x_t @ w_ih.T + b_ih + h @ w_hh.T + b_hh
        i = jax.nn.sigmoid(gates[:, 0 * H:1 * H])
        f = jax.nn.sigmoid(gates[:, 1 * H:2 * H])
        g = jnp.tanh(gates[:, 2 * H:3 * H])
        o = jax.nn.sigmoid(gates[:, 3 * H:4 * H])
        c_new = f * c + i * g
        h_new = o * jnp.tanh(c_new)
        return (h_new, c_new), h_new

    (_, _), hs = jax.lax.scan(step, (h0, c0), inputs)
    return hs @ w_label.T + b_label


if __name__ == "__main__":
    # Small shapes consistent with the module: seq=8, batch=8, input=16,
    # hidden=32, output=8, NUM_LAYERS=1.
    T, B, D_IN, H, O = 8, 8, 16, 32, 8

    key = jax.random.PRNGKey(0)
    ks = jax.random.split(key, 10)

    inputs = jax.random.normal(ks[0], (T, B, D_IN), dtype=jnp.float32)

    # init_hidden: randn initial states (deterministic here via PRNG).
    h0 = jax.random.normal(ks[1], (B, H), dtype=jnp.float32)
    c0 = jax.random.normal(ks[2], (B, H), dtype=jnp.float32)

    # LSTM params, PyTorch default init: U(-1/sqrt(H), 1/sqrt(H)).
    k_lstm = 1.0 / jnp.sqrt(H)
    w_ih = jax.random.uniform(ks[3], (4 * H, D_IN), minval=-k_lstm, maxval=k_lstm)
    w_hh = jax.random.uniform(ks[4], (4 * H, H), minval=-k_lstm, maxval=k_lstm)
    b_ih = jax.random.uniform(ks[5], (4 * H,), minval=-k_lstm, maxval=k_lstm)
    b_hh = jax.random.uniform(ks[6], (4 * H,), minval=-k_lstm, maxval=k_lstm)

    # hidden2label: kaiming_uniform_(fan_in, relu) -> bound = sqrt(6 / fan_in)
    bound_w = jnp.sqrt(6.0 / H)
    w_label = jax.random.uniform(ks[7], (O, H), minval=-bound_w, maxval=bound_w)
    # Linear bias default init: U(-1/sqrt(fan_in), 1/sqrt(fan_in))
    bound_b = 1.0 / jnp.sqrt(H)
    b_label = jax.random.uniform(ks[8], (O,), minval=-bound_b, maxval=bound_b)

    y = ldecoder_forward(inputs, h0, c0, w_ih, w_hh, b_ih, b_hh, w_label, b_label)
    y = jax.block_until_ready(y)

    y_ref = _reference_forward(inputs, h0, c0, w_ih, w_hh, b_ih, b_hh,
                               w_label, b_label)
    assert y.shape == (T, B, O)
    assert jnp.allclose(y, y_ref, atol=1e-5, rtol=1e-5), "mismatch vs reference"

    print("KERNEL_OK")
</pallas_src>

<mosaic_0001>
module attributes {stable_mosaic.version = 11 : i64} {
  func.func @_ldecoder_kernel(%arg0: i32, %arg1: memref<64x16xf32, #tpu.memory_space<vmem>>, %arg2: memref<8x32xf32, #tpu.memory_space<vmem>>, %arg3: memref<8x32xf32, #tpu.memory_space<vmem>>, %arg4: memref<16x128xf32, #tpu.memory_space<vmem>>, %arg5: memref<32x128xf32, #tpu.memory_space<vmem>>, %arg6: memref<1x128xf32, #tpu.memory_space<vmem>>, %arg7: memref<32x128xf32, #tpu.memory_space<vmem>>, %arg8: memref<1x128xf32, #tpu.memory_space<vmem>>, %arg9: memref<64x128xf32, #tpu.memory_space<vmem>>, %arg10: memref<64x128xf32, #tpu.memory_space<vmem>>, %arg11: memref<64x32xf32, #tpu.memory_space<vmem>>) attributes {dimension_semantics = [#tpu.dimension_semantics<arbitrary>], iteration_bounds = array<i64: 1>, scalar_prefetch = 0 : i64, scratch_operands = 2 : i64, tpu.core_type = #tpu.core_type<tc>, window_params = [{pipeline_mode = #tpu.pipeline_mode<synchronous>, transform_indices = @transform_0, window_bounds = array<i64: 64, 16>}, {pipeline_mode = #tpu.pipeline_mode<synchronous>, transform_indices = @transform_1, window_bounds = array<i64: 8, 32>}, {pipeline_mode = #tpu.pipeline_mode<synchronous>, transform_indices = @transform_2, window_bounds = array<i64: 8, 32>}, {pipeline_mode = #tpu.pipeline_mode<synchronous>, transform_indices = @transform_3, window_bounds = array<i64: 16, 128>}, {pipeline_mode = #tpu.pipeline_mode<synchronous>, transform_indices = @transform_4, window_bounds = array<i64: 32, 128>}, {pipeline_mode = #tpu.pipeline_mode<synchronous>, transform_indices = @transform_5, window_bounds = array<i64: 1, 128>}, {pipeline_mode = #tpu.pipeline_mode<synchronous>, transform_indices = @transform_6, window_bounds = array<i64: 32, 128>}, {pipeline_mode = #tpu.pipeline_mode<synchronous>, transform_indices = @transform_7, window_bounds = array<i64: 1, 128>}, {pipeline_mode = #tpu.pipeline_mode<synchronous>, transform_indices = @transform_8, window_bounds = array<i64: 64, 128>}]} {
    %c0 = arith.constant 0 : index
    %c0_0 = arith.constant 0 : index
    %0 = vector.load %arg1[%c0, %c0_0] : memref<64x16xf32, #tpu.memory_space<vmem>>, vector<64x16xf32>
    %c0_1 = arith.constant 0 : index
    %c0_2 = arith.constant 0 : index
    %1 = vector.load %arg4[%c0_1, %c0_2] : memref<16x128xf32, #tpu.memory_space<vmem>>, vector<16x128xf32>
    %cst = arith.constant dense<0.000000e+00> : vector<64x128xf32>
    %2 = tpu.matmul %0, %1, %cst {dimension_numbers = #tpu.dot_dimension_numbers<[1], [0], [0], [1], [0, 0, 1, 1], [], []>} : vector<64x16xf32>, vector<16x128xf32>, vector<64x128xf32> -> vector<64x128xf32>
    %c0_3 = arith.constant 0 : index
    %c0_4 = arith.constant 0 : index
    %3 = vector.load %arg6[%c0_3, %c0_4] : memref<1x128xf32, #tpu.memory_space<vmem>>, vector<1x128xf32>
    %4 = vector.broadcast %3 : vector<1x128xf32> to vector<64x128xf32>
    %5 = arith.addf %2, %4 : vector<64x128xf32>
    %c0_5 = arith.constant 0 : index
    %c0_6 = arith.constant 0 : index
    %6 = vector.load %arg10[%c0_5, %c0_6] : memref<64x128xf32, #tpu.memory_space<vmem>>, vector<64x128xf32>
    tpu.vector_store %arg10[%c0_5, %c0_6], %5 {strides = array<i32>} : memref<64x128xf32, #tpu.memory_space<vmem>>, vector<64x128xf32>,
    %c0_7 = arith.constant 0 : index
    %c0_8 = arith.constant 0 : index
    %7 = vector.load %arg5[%c0_7, %c0_8] : memref<32x128xf32, #tpu.memory_space<vmem>>, vector<32x128xf32>
    %c0_9 = arith.constant 0 : index
    %c0_10 = arith.constant 0 : index
    %8 = vector.load %arg2[%c0_9, %c0_10] : memref<8x32xf32, #tpu.memory_space<vmem>>, vector<8x32xf32>
    %c0_11 = arith.constant 0 : index
    %c0_12 = arith.constant 0 : index
    %9 = vector.load %arg3[%c0_11, %c0_12] : memref<8x32xf32, #tpu.memory_space<vmem>>, vector<8x32xf32>
    %c0_i32 = arith.constant 0 : i32
    %c8_i32 = arith.constant 8 : i32
    %10 = arith.muli %c0_i32, %c8_i32 : i32
    %11 = tpu.assume_multiple %10, 8 : i32
    %12 = arith.index_cast %11 : i32 to index
    %c0_13 = arith.constant 0 : index
    %13 = vector.load %arg10[%12, %c0_13] : memref<64x128xf32, #tpu.memory_space<vmem>>, vector<8x128xf32>
    %cst_14 = arith.constant dense<0.000000e+00> : vector<8x128xf32>
    %14 = tpu.matmul %8, %7, %cst_14 {dimension_numbers = #tpu.dot_dimension_numbers<[1], [0], [0], [1], [0, 0, 1, 1], [], []>} : vector<8x32xf32>, vector<32x128xf32>, vector<8x128xf32> -> vector<8x128xf32>
    %15 = arith.addf %13, %14 : vector<8x128xf32>
    %16 = arith.negf %15 : vector<8x128xf32>
    %17 = math.exp %16 : vector<8x128xf32>
    %cst_15 = arith.constant 1.000000e+00 : f32
    %18 = vector.broadcast %cst_15 : f32 to vector<8x128xf32>
    %19 = arith.addf %18, %17 : vector<8x128xf32>
    %20 = arith.divf %18, %19 : vector<8x128xf32>
    %21 = math.tanh %15 : vector<8x128xf32>
    %22 = vector.extract_strided_slice %20 {offsets = [0, 0], sizes = [8, 32], strides = [1, 1]} : vector<8x128xf32> to vector<8x32xf32>
    %23 = vector.extract_strided_slice %20 {offsets = [0, 32], sizes = [8, 32], strides = [1, 1]} : vector<8x128xf32> to vector<8x32xf32>
    %24 = vector.extract_strided_slice %21 {offsets = [0, 64], sizes = [8, 32], strides = [1, 1]} : vector<8x128xf32> to vector<8x32xf32>
    %25 = vector.extract_strided_slice %20 {offsets = [0, 96], sizes = [8, 32], strides = [1, 1]} : vector<8x128xf32> to vector<8x32xf32>
    %26 = arith.mulf %23, %9 : vector<8x32xf32>
    %27 = arith.mulf %22, %24 : vector<8x32xf32>
    %28 = arith.addf %26, %27 : vector<8x32xf32>
    %29 = math.tanh %28 : vector<8x32xf32>
    %30 = arith.mulf %25, %29 : vector<8x32xf32>
    %31 = arith.index_cast %11 : i32 to index
    %c0_16 = arith.constant 0 : index
    %32 = vector.load %arg11[%31, %c0_16] : memref<64x32xf32, #tpu.memory_space<vmem>>, vector<8x32xf32>
    tpu.vector_store %arg11[%31, %c0_16], %30 {strides = array<i32>} : memref<64x32xf32, #tpu.memory_space<vmem>>, vector<8x32xf32>,
    %c1_i32 = arith.constant 1 : i32
    %c8_i32_17 = arith.constant 8 : i32
    %33 = arith.muli %c1_i32, %c8_i32_17 : i32
    %34 = tpu.assume_multiple %33, 8 : i32
    %35 = arith.index_cast %34 : i32 to index
    %c0_18 = arith.constant 0 : index
    %36 = vector.load %arg10[%35, %c0_18] : memref<64x128xf32, #tpu.memory_space<vmem>>, vector<8x128xf32>
    %cst_19 = arith.constant dense<0.000000e+00> : vector<8x128xf32>
    %37 = tpu.matmul %30, %7, %cst_19 {dimension_numbers = #tpu.dot_dimension_numbers<[1], [0], [0], [1], [0, 0, 1, 1], [], []>} : vector<8x32xf32>, vector<32x128xf32>, vector<8x128xf32> -> vector<8x128xf32>
    %38 = arith.addf %36, %37 : vector<8x128xf32>
    %39 = arith.negf %38 : vector<8x128xf32>
    %40 = math.exp %39 : vector<8x128xf32>
    %cst_20 = arith.constant 1.000000e+00 : f32
    %41 = vector.broadcast %cst_20 : f32 to vector<8x128xf32>
    %42 = arith.addf %41, %40 : vector<8x128xf32>
    %43 = arith.divf %41, %42 : vector<8x128xf32>
    %44 = math.tanh %38 : vector<8x128xf32>
    %45 = vector.extract_strided_slice %43 {offsets = [0, 0], sizes = [8, 32], strides = [1, 1]} : vector<8x128xf32> to vector<8x32xf32>
    %46 = vector.extract_strided_slice %43 {offsets = [0, 32], sizes = [8, 32], strides = [1, 1]} : vector<8x128xf32> to vector<8x32xf32>
    %47 = vector.extract_strided_slice %44 {offsets = [0, 64], sizes = [8, 32], strides = [1, 1]} : vector<8x128xf32> to vector<8x32xf32>
    %48 = vector.extract_strided_slice %43 {offsets = [0, 96], sizes = [8, 32], strides = [1, 1]} : vector<8x128xf32> to vector<8x32xf32>
    %49 = arith.mulf %46, %28 : vector<8x32xf32>
    %50 = arith.mulf %45, %47 : vector<8x32xf32>
    %51 = arith.addf %49, %50 : vector<8x32xf32>
    %52 = math.tanh %51 : vector<8x32xf32>
    %53 = arith.mulf %48, %52 : vector<8x32xf32>
    %54 = arith.index_cast %34 : i32 to index
    %c0_21 = arith.constant 0 : index
    %55 = vector.load %arg11[%54, %c0_21] : memref<64x32xf32, #tpu.memory_space<vmem>>, vector<8x32xf32>
    tpu.vector_store %arg11[%54, %c0_21], %53 {strides = array<i32>} : memref<64x32xf32, #tpu.memory_space<vmem>>, vector<8x32xf32>,
    %c2_i32 = arith.constant 2 : i32
    %c8_i32_22 = arith.constant 8 : i32
    %56 = arith.muli %c2_i32, %c8_i32_22 : i32
    %57 = tpu.assume_multiple %56, 8 : i32
    %58 = arith.index_cast %57 : i32 to index
    %c0_23 = arith.constant 0 : index
    %59 = vector.load %arg10[%58, %c0_23] : memref<64x128xf32, #tpu.memory_space<vmem>>, vector<8x128xf32>
    %cst_24 = arith.constant dense<0.000000e+00> : vector<8x128xf32>
    %60 = tpu.matmul %53, %7, %cst_24 {dimension_numbers = #tpu.dot_dimension_numbers<[1], [0], [0], [1], [0, 0, 1, 1], [], []>} : vector<8x32xf32>, vector<32x128xf32>, vector<8x128xf32> -> vector<8x128xf32>
    %61 = arith.addf %59, %60 : vector<8x128xf32>
    %62 = arith.negf %61 : vector<8x128xf32>
    %63 = math.exp %62 : vector<8x128xf32>
    %cst_25 = arith.constant 1.000000e+00 : f32
    %64 = vector.broadcast %cst_25 : f32 to vector<8x128xf32>
    %65 = arith.addf %64, %63 : vector<8x128xf32>
    %66 = arith.divf %64, %65 : vector<8x128xf32>
    %67 = math.tanh %61 : vector<8x128xf32>
    %68 = vector.extract_strided_slice %66 {offsets = [0, 0], sizes = [8, 32], strides = [1, 1]} : vector<8x128xf32> to vector<8x32xf32>
    %69 = vector.extract_strided_slice %66 {offsets = [0, 32], sizes = [8, 32], strides = [1, 1]} : vector<8x128xf32> to vector<8x32xf32>
    %70 = vector.extract_strided_slice %67 {offsets = [0, 64], sizes = [8, 32], strides = [1, 1]} : vector<8x128xf32> to vector<8x32xf32>
    %71 = vector.extract_strided_slice %66 {offsets = [0, 96], sizes = [8, 32], strides = [1, 1]} : vector<8x128xf32> to vector<8x32xf32>
    %72 = arith.mulf %69, %51 : vector<8x32xf32>
    %73 = arith.mulf %68, %70 : vector<8x32xf32>
    %74 = arith.addf %72, %73 : vector<8x32xf32>
    %75 = math.tanh %74 : vector<8x32xf32>
    %76 = arith.mulf %71, %75 : vector<8x32xf32>
    %77 = arith.index_cast %57 : i32 to index
    %c0_26 = arith.constant 0 : index
    %78 = vector.load %arg11[%77, %c0_26] : memref<64x32xf32, #tpu.memory_space<vmem>>, vector<8x32xf32>
    tpu.vector_store %arg11[%77, %c0_26], %76 {strides = array<i32>} : memref<64x32xf32, #tpu.memory_space<vmem>>, vector<8x32xf32>,
    %c3_i32 = arith.constant 3 : i32
    %c8_i32_27 = arith.constant 8 : i32
    %79 = arith.muli %c3_i32, %c8_i32_27 : i32
    %80 = tpu.assume_multiple %79, 8 : i32
    %81 = arith.index_cast %80 : i32 to index
    %c0_28 = arith.constant 0 : index
    %82 = vector.load %arg10[%81, %c0_28] : memref<64x128xf32, #tpu.memory_space<vmem>>, vector<8x128xf32>
    %cst_29 = arith.constant dense<0.000000e+00> : vector<8x128xf32>
    %83 = tpu.matmul %76, %7, %cst_29 {dimension_numbers = #tpu.dot_dimension_numbers<[1], [0], [0], [1], [0, 0, 1, 1], [], []>} : vector<8x32xf32>, vector<32x128xf32>, vector<8x128xf32> -> vector<8x128xf32>
    %84 = arith.addf %82, %83 : vector<8x128xf32>
    %85 = arith.negf %84 : vector<8x128xf32>
    %86 = math.exp %85 : vector<8x128xf32>
    %cst_30 = arith.constant 1.000000e+00 : f32
    %87 = vector.broadcast %cst_30 : f32 to vector<8x128xf32>
    %88 = arith.addf %87, %86 : vector<8x128xf32>
    %89 = arith.divf %87, %88 : vector<8x128xf32>
    %90 = math.tanh %84 : vector<8x128xf32>
    %91 = vector.extract_strided_slice %89 {offsets = [0, 0], sizes = [8, 32], strides = [1, 1]} : vector<8x128xf32> to vector<8x32xf32>
    %92 = vector.extract_strided_slice %89 {offsets = [0, 32], sizes = [8, 32], strides = [1, 1]} : vector<8x128xf32> to vector<8x32xf32>
    %93 = vector.extract_strided_slice %90 {offsets = [0, 64], sizes = [8, 32], strides = [1, 1]} : vector<8x128xf32> to vector<8x32xf32>
    %94 = vector.extract_strided_slice %89 {offsets = [0, 96], sizes = [8, 32], strides = [1, 1]} : vector<8x128xf32> to vector<8x32xf32>
    %95 = arith.mulf %92, %74 : vector<8x32xf32>
    %96 = arith.mulf %91, %93 : vector<8x32xf32>
    %97 = arith.addf %95, %96 : vector<8x32xf32>
    %98 = math.tanh %97 : vector<8x32xf32>
    %99 = arith.mulf %94, %98 : vector<8x32xf32>
    %100 = arith.index_cast %80 : i32 to index
    %c0_31 = arith.constant 0 : index
    %101 = vector.load %arg11[%100, %c0_31] : memref<64x32xf32, #tpu.memory_space<vmem>>, vector<8x32xf32>
    tpu.vector_store %arg11[%100, %c0_31], %99 {strides = array<i32>} : memref<64x32xf32, #tpu.memory_space<vmem>>, vector<8x32xf32>,
    %c4_i32 = arith.constant 4 : i32
    %c8_i32_32 = arith.constant 8 : i32
    %102 = arith.muli %c4_i32, %c8_i32_32 : i32
    %103 = tpu.assume_multiple %102, 8 : i32
    %104 = arith.index_cast %103 : i32 to index
    %c0_33 = arith.constant 0 : index
    %105 = vector.load %arg10[%104, %c0_33] : memref<64x128xf32, #tpu.memory_space<vmem>>, vector<8x128xf32>
    %cst_34 = arith.constant dense<0.000000e+00> : vector<8x128xf32>
    %106 = tpu.matmul %99, %7, %cst_34 {dimension_numbers = #tpu.dot_dimension_numbers<[1], [0], [0], [1], [0, 0, 1, 1], [], []>} : vector<8x32xf32>, vector<32x128xf32>, vector<8x128xf32> -> vector<8x128xf32>
    %107 = arith.addf %105, %106 : vector<8x128xf32>
    %108 = arith.negf %107 : vector<8x128xf32>
    %109 = math.exp %108 : vector<8x128xf32>
    %cst_35 = arith.constant 1.000000e+00 : f32
    %110 = vector.broadcast %cst_35 : f32 to vector<8x128xf32>
    %111 = arith.addf %110, %109 : vector<8x128xf32>
    %112 = arith.divf %110, %111 : vector<8x128xf32>
    %113 = math.tanh %107 : vector<8x128xf32>
    %114 = vector.extract_strided_slice %112 {offsets = [0, 0], sizes = [8, 32], strides = [1, 1]} : vector<8x128xf32> to vector<8x32xf32>
    %115 = vector.extract_strided_slice %112 {offsets = [0, 32], sizes = [8, 32], strides = [1, 1]} : vector<8x128xf32> to vector<8x32xf32>
    %116 = vector.extract_strided_slice %113 {offsets = [0, 64], sizes = [8, 32], strides = [1, 1]} : vector<8x128xf32> to vector<8x32xf32>
    %117 = vector.extract_strided_slice %112 {offsets = [0, 96], sizes = [8, 32], strides = [1, 1]} : vector<8x128xf32> to vector<8x32xf32>
    %118 = arith.mulf %115, %97 : vector<8x32xf32>
    %119 = arith.mulf %114, %116 : vector<8x32xf32>
    %120 = arith.addf %118, %119 : vector<8x32xf32>
    %121 = math.tanh %120 : vector<8x32xf32>
    %122 = arith.mulf %117, %121 : vector<8x32xf32>
    %123 = arith.index_cast %103 : i32 to index
    %c0_36 = arith.constant 0 : index
    %124 = vector.load %arg11[%123, %c0_36] : memref<64x32xf32, #tpu.memory_space<vmem>>, vector<8x32xf32>
    tpu.vector_store %arg11[%123, %c0_36], %122 {strides = array<i32>} : memref<64x32xf32, #tpu.memory_space<vmem>>, vector<8x32xf32>,
    %c5_i32 = arith.constant 5 : i32
    %c8_i32_37 = arith.constant 8 : i32
    %125 = arith.muli %c5_i32, %c8_i32_37 : i32
    %126 = tpu.assume_multiple %125, 8 : i32
    %127 = arith.index_cast %126 : i32 to index
    %c0_38 = arith.constant 0 : index
    %128 = vector.load %arg10[%127, %c0_38] : memref<64x128xf32, #tpu.memory_space<vmem>>, vector<8x128xf32>
    %cst_39 = arith.constant dense<0.000000e+00> : vector<8x128xf32>
    %129 = tpu.matmul %122, %7, %cst_39 {dimension_numbers = #tpu.dot_dimension_numbers<[1], [0], [0], [1], [0, 0, 1, 1], [], []>} : vector<8x32xf32>, vector<32x128xf32>, vector<8x128xf32> -> vector<8x128xf32>
    %130 = arith.addf %128, %129 : vector<8x128xf32>
    %131 = arith.negf %130 : vector<8x128xf32>
    %132 = math.exp %131 : vector<8x128xf32>
    %cst_40 = arith.constant 1.000000e+00 : f32
    %133 = vector.broadcast %cst_40 : f32 to vector<8x128xf32>
    %134 = arith.addf %133, %132 : vector<8x128xf32>
    %135 = arith.divf %133, %134 : vector<8x128xf32>
    %136 = math.tanh %130 : vector<8x128xf32>
    %137 = vector.extract_strided_slice %135 {offsets = [0, 0], sizes = [8, 32], strides = [1, 1]} : vector<8x128xf32> to vector<8x32xf32>
    %138 = vector.extract_strided_slice %135 {offsets = [0, 32], sizes = [8, 32], strides = [1, 1]} : vector<8x128xf32> to vector<8x32xf32>
    %139 = vector.extract_strided_slice %136 {offsets = [0, 64], sizes = [8, 32], strides = [1, 1]} : vector<8x128xf32> to vector<8x32xf32>
    %140 = vector.extract_strided_slice %135 {offsets = [0, 96], sizes = [8, 32], strides = [1, 1]} : vector<8x128xf32> to vector<8x32xf32>
    %141 = arith.mulf %138, %120 : vector<8x32xf32>
    %142 = arith.mulf %137, %139 : vector<8x32xf32>
    %143 = arith.addf %141, %142 : vector<8x32xf32>
    %144 = math.tanh %143 : vector<8x32xf32>
    %145 = arith.mulf %140, %144 : vector<8x32xf32>
    %146 = arith.index_cast %126 : i32 to index
    %c0_41 = arith.constant 0 : index
    %147 = vector.load %arg11[%146, %c0_41] : memref<64x32xf32, #tpu.memory_space<vmem>>, vector<8x32xf32>
    tpu.vector_store %arg11[%146, %c0_41], %145 {strides = array<i32>} : memref<64x32xf32, #tpu.memory_space<vmem>>, vector<8x32xf32>,
    %c6_i32 = arith.constant 6 : i32
    %c8_i32_42 = arith.constant 8 : i32
    %148 = arith.muli %c6_i32, %c8_i32_42 : i32
    %149 = tpu.assume_multiple %148, 8 : i32
    %150 = arith.index_cast %149 : i32 to index
    %c0_43 = arith.constant 0 : index
    %151 = vector.load %arg10[%150, %c0_43] : memref<64x128xf32, #tpu.memory_space<vmem>>, vector<8x128xf32>
    %cst_44 = arith.constant dense<0.000000e+00> : vector<8x128xf32>
    %152 = tpu.matmul %145, %7, %cst_44 {dimension_numbers = #tpu.dot_dimension_numbers<[1], [0], [0], [1], [0, 0, 1, 1], [], []>} : vector<8x32xf32>, vector<32x128xf32>, vector<8x128xf32> -> vector<8x128xf32>
    %153 = arith.addf %151, %152 : vector<8x128xf32>
    %154 = arith.negf %153 : vector<8x128xf32>
    %155 = math.exp %154 : vector<8x128xf32>
    %cst_45 = arith.constant 1.000000e+00 : f32
    %156 = vector.broadcast %cst_45 : f32 to vector<8x128xf32>
    %157 = arith.addf %156, %155 : vector<8x128xf32>
    %158 = arith.divf %156, %157 : vector<8x128xf32>
    %159 = math.tanh %153 : vector<8x128xf32>
    %160 = vector.extract_strided_slice %158 {offsets = [0, 0], sizes = [8, 32], strides = [1, 1]} : vector<8x128xf32> to vector<8x32xf32>
    %161 = vector.extract_strided_slice %158 {offsets = [0, 32], sizes = [8, 32], strides = [1, 1]} : vector<8x128xf32> to vector<8x32xf32>
    %162 = vector.extract_strided_slice %159 {offsets = [0, 64], sizes = [8, 32], strides = [1, 1]} : vector<8x128xf32> to vector<8x32xf32>
    %163 = vector.extract_strided_slice %158 {offsets = [0, 96], sizes = [8, 32], strides = [1, 1]} : vector<8x128xf32> to vector<8x32xf32>
    %164 = arith.mulf %161, %143 : vector<8x32xf32>
    %165 = arith.mulf %160, %162 : vector<8x32xf32>
    %166 = arith.addf %164, %165 : vector<8x32xf32>
    %167 = math.tanh %166 : vector<8x32xf32>
    %168 = arith.mulf %163, %167 : vector<8x32xf32>
    %169 = arith.index_cast %149 : i32 to index
    %c0_46 = arith.constant 0 : index
    %170 = vector.load %arg11[%169, %c0_46] : memref<64x32xf32, #tpu.memory_space<vmem>>, vector<8x32xf32>
    tpu.vector_store %arg11[%169, %c0_46], %168 {strides = array<i32>} : memref<64x32xf32, #tpu.memory_space<vmem>>, vector<8x32xf32>,
    %c7_i32 = arith.constant 7 : i32
    %c8_i32_47 = arith.constant 8 : i32
    %171 = arith.muli %c7_i32, %c8_i32_47 : i32
    %172 = tpu.assume_multiple %171, 8 : i32
    %173 = arith.index_cast %172 : i32 to index
    %c0_48 = arith.constant 0 : index
    %174 = vector.load %arg10[%173, %c0_48] : memref<64x128xf32, #tpu.memory_space<vmem>>, vector<8x128xf32>
    %cst_49 = arith.constant dense<0.000000e+00> : vector<8x128xf32>
    %175 = tpu.matmul %168, %7, %cst_49 {dimension_numbers = #tpu.dot_dimension_numbers<[1], [0], [0], [1], [0, 0, 1, 1], [], []>} : vector<8x32xf32>, vector<32x128xf32>, vector<8x128xf32> -> vector<8x128xf32>
    %176 = arith.addf %174, %175 : vector<8x128xf32>
    %177 = arith.negf %176 : vector<8x128xf32>
    %178 = math.exp %177 : vector<8x128xf32>
    %cst_50 = arith.constant 1.000000e+00 : f32
    %179 = vector.broadcast %cst_50 : f32 to vector<8x128xf32>
    %180 = arith.addf %179, %178 : vector<8x128xf32>
    %181 = arith.divf %179, %180 : vector<8x128xf32>
    %182 = math.tanh %176 : vector<8x128xf32>
    %183 = vector.extract_strided_slice %181 {offsets = [0, 0], sizes = [8, 32], strides = [1, 1]} : vector<8x128xf32> to vector<8x32xf32>
    %184 = vector.extract_strided_slice %181 {offsets = [0, 32], sizes = [8, 32], strides = [1, 1]} : vector<8x128xf32> to vector<8x32xf32>
    %185 = vector.extract_strided_slice %182 {offsets = [0, 64], sizes = [8, 32], strides = [1, 1]} : vector<8x128xf32> to vector<8x32xf32>
    %186 = vector.extract_strided_slice %181 {offsets = [0, 96], sizes = [8, 32], strides = [1, 1]} : vector<8x128xf32> to vector<8x32xf32>
    %187 = arith.mulf %184, %166 : vector<8x32xf32>
    %188 = arith.mulf %183, %185 : vector<8x32xf32>
    %189 = arith.addf %187, %188 : vector<8x32xf32>
    %190 = math.tanh %189 : vector<8x32xf32>
    %191 = arith.mulf %186, %190 : vector<8x32xf32>
    %192 = arith.index_cast %172 : i32 to index
    %c0_51 = arith.constant 0 : index
    %193 = vector.load %arg11[%192, %c0_51] : memref<64x32xf32, #tpu.memory_space<vmem>>, vector<8x32xf32>
    tpu.vector_store %arg11[%192, %c0_51], %191 {strides = array<i32>} : memref<64x32xf32, #tpu.memory_space<vmem>>, vector<8x32xf32>,
    %c8_i32_52 = arith.constant 8 : i32
    %c0_53 = arith.constant 0 : index
    %c0_54 = arith.constant 0 : index
    %194 = vector.load %arg11[%c0_53, %c0_54] : memref<64x32xf32, #tpu.memory_space<vmem>>, vector<64x32xf32>
    %c0_55 = arith.constant 0 : index
    %c0_56 = arith.constant 0 : index
    %195 = vector.load %arg7[%c0_55, %c0_56] : memref<32x128xf32, #tpu.memory_space<vmem>>, vector<32x128xf32>
    %cst_57 = arith.constant dense<0.000000e+00> : vector<64x128xf32>
    %196 = tpu.matmul %194, %195, %cst_57 {dimension_numbers = #tpu.dot_dimension_numbers<[1], [0], [0], [1], [0, 0, 1, 1], [], []>} : vector<64x32xf32>, vector<32x128xf32>, vector<64x128xf32> -> vector<64x128xf32>
    %c0_58 = arith.constant 0 : index
    %c0_59 = arith.constant 0 : index
    %197 = vector.load %arg8[%c0_58, %c0_59] : memref<1x128xf32, #tpu.memory_space<vmem>>, vector<1x128xf32>
    %198 = vector.broadcast %197 : vector<1x128xf32> to vector<64x128xf32>
    %199 = arith.addf %196, %198 : vector<64x128xf32>
    %c0_60 = arith.constant 0 : index
    %c0_61 = arith.constant 0 : index
    %200 = vector.load %arg9[%c0_60, %c0_61] : memref<64x128xf32, #tpu.memory_space<vmem>>, vector<64x128xf32>
    tpu.vector_store %arg9[%c0_60, %c0_61], %199 {strides = array<i32>} : memref<64x128xf32, #tpu.memory_space<vmem>>, vector<64x128xf32>,
    return
  }
  func.func @transform_0(%arg0: i32) -> (i32, i32) {
    %c0_i32 = arith.constant 0 : i32
    %c0_i32_0 = arith.constant 0 : i32
    %c0_i32_1 = arith.constant 0 : i32
    return %c0_i32, %c0_i32_0 : i32, i32
  }
  func.func @transform_1(%arg0: i32) -> (i32, i32) {
    %c0_i32 = arith.constant 0 : i32
    %c0_i32_0 = arith.constant 0 : i32
    %c0_i32_1 = arith.constant 0 : i32
    return %c0_i32, %c0_i32_0 : i32, i32
  }
  func.func @transform_2(%arg0: i32) -> (i32, i32) {
    %c0_i32 = arith.constant 0 : i32
    %c0_i32_0 = arith.constant 0 : i32
    %c0_i32_1 = arith.constant 0 : i32
    return %c0_i32, %c0_i32_0 : i32, i32
  }
  func.func @transform_3(%arg0: i32) -> (i32, i32) {
    %c0_i32 = arith.constant 0 : i32
    %c0_i32_0 = arith.constant 0 : i32
    %c0_i32_1 = arith.constant 0 : i32
    return %c0_i32, %c0_i32_0 : i32, i32
  }
  func.func @transform_4(%arg0: i32) -> (i32, i32) {
    %c0_i32 = arith.constant 0 : i32
    %c0_i32_0 = arith.constant 0 : i32
    %c0_i32_1 = arith.constant 0 : i32
    return %c0_i32, %c0_i32_0 : i32, i32
  }
  func.func @transform_5(%arg0: i32) -> (i32, i32) {
    %c0_i32 = arith.constant 0 : i32
    %c0_i32_0 = arith.constant 0 : i32
    %c0_i32_1 = arith.constant 0 : i32
    return %c0_i32, %c0_i32_0 : i32, i32
  }
  func.func @transform_6(%arg0: i32) -> (i32, i32) {
    %c0_i32 = arith.constant 0 : i32
    %c0_i32_0 = arith.constant 0 : i32
    %c0_i32_1 = arith.constant 0 : i32
    return %c0_i32, %c0_i32_0 : i32, i32
  }
  func.func @transform_7(%arg0: i32) -> (i32, i32) {
    %c0_i32 = arith.constant 0 : i32
    %c0_i32_0 = arith.constant 0 : i32
    %c0_i32_1 = arith.constant 0 : i32
    return %c0_i32, %c0_i32_0 : i32, i32
  }
  func.func @transform_8(%arg0: i32) -> (i32, i32) {
    %c0_i32 = arith.constant 0 : i32
    %c0_i32_0 = arith.constant 0 : i32
    %c0_i32_1 = arith.constant 0 : i32
    return %c0_i32, %c0_i32_0 : i32, i32
  }
}

</mosaic_0001>

<llo_original>
// kernel: tpu_custom_call.1
$region0: #{tpu_custom_call.1}
  #allocation0 [shape = 'u32[]', space=smem, size = 0x4, offset = 0x4, fixed_abs, tag = 'smem constant byte address 0x4 - core index']
  #allocation1 [shape = 'u32[144,128]{1,0:T(1,128)}', space=vmem, size = 0x12000, scoped, tag = 'internal scratch']
  #allocation2 [shape = 'f32[64,128]{1,0:T(8,128)}', space=vmem, size = 0x8000, scoped, tag = 'scratch operand']
  #allocation3 [shape = 'f32[64,32]{1,0:T(8,128)}', space=vmem, size = 0x8000, scoped, tag = 'scratch operand']
  %s0 = inlined_call_operand.vmem [shape: f32[64,16], index: 0, kind: input, shape index: {}]
  %s1 = inlined_call_operand.hbm [shape: f32[8,32], index: 1, kind: input, shape index: {}]
  %s2 = inlined_call_operand.hbm [shape: f32[8,32], index: 2, kind: input, shape index: {}]
  %s3 = inlined_call_operand.vmem [shape: f32[16,128], index: 3, kind: input, shape index: {}]
  %s4 = inlined_call_operand.vmem [shape: f32[32,128], index: 4, kind: input, shape index: {}]
  %s5 = inlined_call_operand.vmem [shape: f32[1,128], index: 5, kind: input, shape index: {}]
  %s6 = inlined_call_operand.vmem [shape: f32[32,128], index: 6, kind: input, shape index: {}]
  %s7 = inlined_call_operand.vmem [shape: f32[1,128], index: 7, kind: input, shape index: {}]
  %s8 = inlined_call_operand.hbm [shape: f32[64,128], index: 8, kind: output, shape index: {}]
  %s9 = sld [smem:[#allocation0]]
  $region50: #{tpu_custom_call.1} parent=0
    _
  %s11 = ssub.s32 1, %s9
  %s12 = scalar_select 0, %s11, %s9
  $region1: #{tpu_custom_call.1} parent=0
    #allocation4 [shape = 'u8[4096]{0}', space=vmem, size = 0x1000, scoped, tag = 'input window, operand 1, single buffered']
    #allocation5 [shape = 's32[1]{0}', space=sflag, size = 0x4, scoped, tag = 'scoped memory for tpu_custom_call.1']
    #allocation6 [shape = 's32[1]{0}', space=sflag, size = 0x4, scoped, tag = 'scoped memory for tpu_custom_call.1']
    #allocation7 [shape = 'u8[4096]{0}', space=vmem, size = 0x1000, scoped, tag = 'input window, operand 2, single buffered']
    #allocation8 [shape = 's32[1]{0}', space=sflag, size = 0x4, scoped, tag = 'scoped memory for tpu_custom_call.1']
    #allocation9 [shape = 'u8[32768]{0}', space=vmem, size = 0x8000, scoped, tag = 'output window, operand 0, single buffered']
    %13 = vsyncpa [#allocation5], 0
    %14 = vsyncpa [#allocation8], 0
    %15 = vsyncpa [#allocation6], 0
    // Predicated region
    $region2: #{tpu_custom_call.1} parent=1 // pred_check
      _
    $region3: #{tpu_custom_call.1} parent=1 // pred_check_branch
      %17 = sbr.rel (0) target = $region5
    $region4: #{tpu_custom_call.1} parent=1 // pred_region
      _
    $region5: #{tpu_custom_call.1} parent=1 // pred_fallthru
      _
    // Predicated region
    $region6: #{tpu_custom_call.1} parent=1 // pred_check
      _
    $region7: #{tpu_custom_call.1} parent=1 // pred_check_branch
      %19 = sbr.rel (0) target = $region9
    $region8: #{tpu_custom_call.1} parent=1 // pred_region
      %s21 = ssub.s32 128, 128
      %22 = vsyncadd [#allocation5], %s21
      %s24 = sshll.u32 [#allocation4], 4
      %s25 = int_to_ptr.vmem [resolvable:$true] %s24
      %27 = dma.hbm_to_vmem [thread:$0]  %s1, 128, %s25, [#allocation5]
    $region9: #{tpu_custom_call.1} parent=1 // pred_fallthru
      _
    // Predicated region
    $region10: #{tpu_custom_call.1} parent=1 // pred_check
      _
    $region11: #{tpu_custom_call.1} parent=1 // pred_check_branch
      %29 = sbr.rel (0) target = $region13
    $region12: #{tpu_custom_call.1} parent=1 // pred_region
      %s31 = ssub.s32 128, 128
      %32 = vsyncadd [#allocation8], %s31
      %s34 = sshll.u32 [#allocation7], 4
      %s35 = int_to_ptr.vmem [resolvable:$true] %s34
      %37 = dma.hbm_to_vmem [thread:$0]  %s2, 128, %s35, [#allocation8]
    $region13: #{tpu_custom_call.1} parent=1 // pred_fallthru
      _
    // Predicated region
    $region14: #{tpu_custom_call.1} parent=1 // pred_check
      _
    $region15: #{tpu_custom_call.1} parent=1 // pred_check_branch
      %39 = sbr.rel (0) target = $region17
    $region16: #{tpu_custom_call.1} parent=1 // pred_region
      _
    $region17: #{tpu_custom_call.1} parent=1 // pred_fallthru
      _
    // Predicated region
    $region18: #{tpu_custom_call.1} parent=1 // pred_check
      _
    $region19: #{tpu_custom_call.1} parent=1 // pred_check_branch
      %41 = sbr.rel (0) target = $region21
    $region20: #{tpu_custom_call.1} parent=1 // pred_region
      _
    $region21: #{tpu_custom_call.1} parent=1 // pred_fallthru
      _
    // Predicated region
    $region22: #{tpu_custom_call.1} parent=1 // pred_check
      _
    $region23: #{tpu_custom_call.1} parent=1 // pred_check_branch
      %43 = sbr.rel (0) target = $region25
    $region24: #{tpu_custom_call.1} parent=1 // pred_region
      _
    $region25: #{tpu_custom_call.1} parent=1 // pred_fallthru
      _
    // Predicated region
    $region26: #{tpu_custom_call.1} parent=1 // pred_check
      _
    $region27: #{tpu_custom_call.1} parent=1 // pred_check_branch
      %45 = sbr.rel (0) target = $region29
    $region28: #{tpu_custom_call.1} parent=1 // pred_region
      _
    $region29: #{tpu_custom_call.1} parent=1 // pred_fallthru
      _
    // Predicated region
    $region30: #{tpu_custom_call.1} parent=1 // pred_check
      _
    $region31: #{tpu_custom_call.1} parent=1 // pred_check_branch
      %47 = sbr.rel (0) target = $region33
    $region32: #{tpu_custom_call.1} parent=1 // pred_region
      _
    $region33: #{tpu_custom_call.1} parent=1 // pred_fallthru
      _
    // Predicated region
    $region34: #{tpu_custom_call.1} parent=1 // pred_check
      _
    $region35: #{tpu_custom_call.1} parent=1 // pred_check_branch
      %49 = sbr.rel (0) target = $region37
    $region36: #{tpu_custom_call.1} parent=1 // pred_region
      %50 = dma.done [#allocation5], 128
    $region37: #{tpu_custom_call.1} parent=1 // pred_fallthru
      _
    // Predicated region
    $region38: #{tpu_custom_call.1} parent=1 // pred_check
      _
    $region39: #{tpu_custom_call.1} parent=1 // pred_check_branch
      %52 = sbr.rel (0) target = $region41
    $region40: #{tpu_custom_call.1} parent=1 // pred_region
      %53 = dma.done [#allocation8], 128
    $region41: #{tpu_custom_call.1} parent=1 // pred_fallthru
      _
    %v54 = vld [vmem:[%s0] sm:$0xff]
    %v55 = vld [vmem:[%s0 + $0x8] sm:$0xff]
    %v56 = vld [vmem:[%s0 + $0x10] sm:$0xff]
    %v57 = vld [vmem:[%s0 + $0x18] sm:$0xff]
    %v58 = vld [vmem:[%s0 + $0x20] sm:$0xff]
    %v59 = vld [vmem:[%s0 + $0x28] sm:$0xff]
    %v60 = vld [vmem:[%s0 + $0x30] sm:$0xff]
    %v61 = vld [vmem:[%s0 + $0x38] sm:$0xff]
    %v62 = vld [vmem:[%s3] sm:$0xff]
    %v63 = vld [vmem:[%s3 + $0x8] sm:$0xff]
    %v64 = vld [vmem:[%s5] sm:$0x1]
    %v66 = vlaneseq
    %v67 = vshrl.u32 %v66, 7
    %v68 = vsub.s32 0, %v67
    %v69 = vrot.slane %v64, %v68
    %vm71 = vcmask 130048
    %v73 = vsel %vm71, %v54, 0
    %v76 = vsel %vm71, %v55, 0
    %v79 = vsel %vm71, %v56, 0
    %v82 = vsel %vm71, %v57, 0
    %v85 = vsel %vm71, %v58, 0
    %v88 = vsel %vm71, %v59, 0
    %v91 = vsel %vm71, %v60, 0
    %v94 = vsel %vm71, %v61, 0
    %96 = vmatprep.subr.mxu0 0.0
    %97 = vmatpush1.msra.mxu0 0.0
    %98 = vmatprep.subr.mxu0 0.0
    %99 = vmatpush1.msra.mxu0 0.0
    %100 = vmatprep.subr.mxu0 0.0
    %101 = vmatpush1.msra.mxu0 0.0
    %102 = vmatprep.subr.mxu0 0.0
    %103 = vmatpush1.msra.mxu0 0.0
    %104 = vmatprep.subr.mxu0 0.0
    %105 = vmatpush1.msra.mxu0 0.0
    %106 = vmatprep.subr.mxu0 0.0
    %107 = vmatpush1.msra.mxu0 0.0
    %108 = vmatprep.subr.mxu0 0.0
    %109 = vmatpush1.msra.mxu0 0.0
    %110 = vmatprep.subr.mxu0 0.0
    %111 = vmatpush1.msra.mxu0 0.0
    %112 = vmatprep.subr.mxu0 0.0
    %113 = vmatpush1.msra.mxu0 0.0
    %114 = vmatprep.subr.mxu0 0.0
    %115 = vmatpush1.msra.mxu0 0.0
    %116 = vmatprep.subr.mxu0 0.0
    %117 = vmatpush1.msra.mxu0 0.0
    %118 = vmatprep.subr.mxu0 0.0
    %119 = vmatpush1.msra.mxu0 0.0
    %120 = vmatprep.subr.mxu0 0.0
    %121 = vmatpush1.msra.mxu0 0.0
    %122 = vmatprep.subr.mxu0 0.0
    %123 = vmatpush1.msra.mxu0 0.0
    %124 = vmatprep.subr.mxu0 0.0
    %125 = vmatpush1.msra.mxu0 %v63
    %126 = vmatprep.subr.mxu0 0.0
    %127 = vmatpush1.msra.mxu0 %v62
    %128 = vmatprep.subr.mxu0 0.0
    %129 = vmatpush2.msra.mxu0 0.0
    %130 = vmatprep.subr.mxu0 0.0
    %131 = vmatpush2.msra.mxu0 0.0
    %132 = vmatprep.subr.mxu0 0.0
    %133 = vmatpush2.msra.mxu0 0.0
    %134 = vmatprep.subr.mxu0 0.0
    %135 = vmatpush2.msra.mxu0 0.0
    %136 = vmatprep.subr.mxu0 0.0
    %137 = vmatpush2.msra.mxu0 0.0
    %138 = vmatprep.subr.mxu0 0.0
    %139 = vmatpush2.msra.mxu0 0.0
    %140 = vmatprep.subr.mxu0 0.0
    %141 = vmatpush2.msra.mxu0 0.0
    %142 = vmatprep.subr.mxu0 0.0
    %143 = vmatpush2.msra.mxu0 0.0
    %144 = vmatprep.subr.mxu0 0.0
    %145 = vmatpush2.msra.mxu0 0.0
    %146 = vmatprep.subr.mxu0 0.0
    %147 = vmatpush2.msra.mxu0 0.0
    %148 = vmatprep.subr.mxu0 0.0
    %149 = vmatpush2.msra.mxu0 0.0
    %150 = vmatprep.subr.mxu0 0.0
    %151 = vmatpush2.msra.mxu0 0.0
    %152 = vmatprep.subr.mxu0 0.0
    %153 = vmatpush2.msra.mxu0 0.0
    %154 = vmatprep.subr.mxu0 0.0
    %155 = vmatpush2.msra.mxu0 0.0
    %156 = vmatprep.subr.mxu0 0.0
    %157 = vmatpush2.msra.mxu0 0.0
    %158 = vmatprep.subr.mxu0 0.0
    %159 = vmatpush2.msra.mxu0 0.0
    %160 = vmatprep.mubr.f32.mxu0 0.0
    %161 = vmatmul.mubr.f32.gmra.mxu0 %v73
    %v162 = vpop.f32.mrf.mxu0
    %v163 = vadd.f32 %v69, %v162
    %v164 = vpop.f32.mrf.mxu0
    %165 = vmatprep.mubr.f32.mxu0 0.0
    %166 = vmatmul.mubr.f32.gmra.mxu0 %v76
    %v167 = vpop.f32.mrf.mxu0
    %v168 = vadd.f32 %v69, %v167
    %v169 = vpop.f32.mrf.mxu0
    %170 = vmatprep.mubr.f32.mxu0 0.0
    %171 = vmatmul.mubr.f32.gmra.mxu0 %v79
    %v172 = vpop.f32.mrf.mxu0
    %v173 = vadd.f32 %v69, %v172
    %v174 = vpop.f32.mrf.mxu0
    %175 = vmatprep.mubr.f32.mxu0 0.0
    %176 = vmatmul.mubr.f32.gmra.mxu0 %v82
    %v177 = vpop.f32.mrf.mxu0
    %v178 = vadd.f32 %v69, %v177
    %v179 = vpop.f32.mrf.mxu0
    %180 = vmatprep.mubr.f32.mxu0 0.0
    %181 = vmatmul.mubr.f32.gmra.mxu0 %v85
    %v182 = vpop.f32.mrf.mxu0
    %v183 = vadd.f32 %v69, %v182
    %v184 = vpop.f32.mrf.mxu0
    %185 = vmatprep.mubr.f32.mxu0 0.0
    %186 = vmatmul.mubr.f32.gmra.mxu0 %v88
    %v187 = vpop.f32.mrf.mxu0
    %v188 = vadd.f32 %v69, %v187
    %v189 = vpop.f32.mrf.mxu0
    %190 = vmatprep.mubr.f32.mxu0 0.0
    %191 = vmatmul.mubr.f32.gmra.mxu0 %v91
    %v192 = vpop.f32.mrf.mxu0
    %v193 = vadd.f32 %v69, %v192
    %v194 = vpop.f32.mrf.mxu0
    %195 = vmatprep.mubr.f32.mxu0 0.0
    %196 = vmatmul.mubr.f32.gmra.mxu0 %v94
    %v197 = vpop.f32.mrf.mxu0
    %v198 = vadd.f32 %v69, %v197
    %v199 = vpop.f32.mrf.mxu0
    %200 = vdwg.mxu0
    %201 = vst [vmem:[#allocation2] sm:$0xff] %v163
    %202 = vst [vmem:[#allocation2 + $0x8] sm:$0xff] %v168
    %203 = vst [vmem:[#allocation2 + $0x10] sm:$0xff] %v173
    %204 = vst [vmem:[#allocation2 + $0x18] sm:$0xff] %v178
    %205 = vst [vmem:[#allocation2 + $0x20] sm:$0xff] %v183
    %206 = vst [vmem:[#allocation2 + $0x28] sm:$0xff] %v188
    %207 = vst [vmem:[#allocation2 + $0x30] sm:$0xff] %v193
    %208 = vst [vmem:[#allocation2 + $0x38] sm:$0xff] %v198
    %v209 = vld [vmem:[%s4] sm:$0xff]
    %v210 = vld [vmem:[%s4 + $0x8] sm:$0xff]
    %v211 = vld [vmem:[%s4 + $0x10] sm:$0xff]
    %v212 = vld [vmem:[%s4 + $0x18] sm:$0xff]
    %v213 = vld [vmem:[#allocation4] sm:$0xff]
    %v214 = vld [vmem:[#allocation7] sm:$0xff]
    %v215 = vld [vmem:[#allocation2] sm:$0xff]
    %vm216 = vcmask 261120
    %v218 = vsel %vm216, %v213, 0
    %220 = vmatprep.subr.mxu0 0.0
    %221 = vmatpush1.msra.mxu0 0.0
    %222 = vmatprep.subr.mxu0 0.0
    %223 = vmatpush1.msra.mxu0 0.0
    %224 = vmatprep.subr.mxu0 0.0
    %225 = vmatpush1.msra.mxu0 0.0
    %226 = vmatprep.subr.mxu0 0.0
    %227 = vmatpush1.msra.mxu0 0.0
    %228 = vmatprep.subr.mxu0 0.0
    %229 = vmatpush1.msra.mxu0 0.0
    %230 = vmatprep.subr.mxu0 0.0
    %231 = vmatpush1.msra.mxu0 0.0
    %232 = vmatprep.subr.mxu0 0.0
    %233 = vmatpush1.msra.mxu0 0.0
    %234 = vmatprep.subr.mxu0 0.0
    %235 = vmatpush1.msra.mxu0 0.0
    %236 = vmatprep.subr.mxu0 0.0
    %237 = vmatpush1.msra.mxu0 0.0
    %238 = vmatprep.subr.mxu0 0.0
    %239 = vmatpush1.msra.mxu0 0.0
    %240 = vmatprep.subr.mxu0 0.0
    %241 = vmatpush1.msra.mxu0 0.0
    %242 = vmatprep.subr.mxu0 0.0
    %243 = vmatpush1.msra.mxu0 0.0
    %244 = vmatprep.subr.mxu0 0.0
    %245 = vmatpush1.msra.mxu0 %v212
    %246 = vmatprep.subr.mxu0 0.0
    %247 = vmatpush1.msra.mxu0 %v211
    %248 = vmatprep.subr.mxu0 0.0
    %249 = vmatpush1.msra.mxu0 %v210
    %250 = vmatprep.subr.mxu0 0.0
    %251 = vmatpush1.msra.mxu0 %v209
    %252 = vmatprep.subr.mxu0 0.0
    %253 = vmatpush2.msra.mxu0 0.0
    %254 = vmatprep.subr.mxu0 0.0
    %255 = vmatpush2.msra.mxu0 0.0
    %256 = vmatprep.subr.mxu0 0.0
    %257 = vmatpush2.msra.mxu0 0.0
    %258 = vmatprep.subr.mxu0 0.0
    %259 = vmatpush2.msra.mxu0 0.0
    %260 = vmatprep.subr.mxu0 0.0
    %261 = vmatpush2.msra.mxu0 0.0
    %262 = vmatprep.subr.mxu0 0.0
    %263 = vmatpush2.msra.mxu0 0.0
    %264 = vmatprep.subr.mxu0 0.0
    %265 = vmatpush2.msra.mxu0 0.0
    %266 = vmatprep.subr.mxu0 0.0
    %267 = vmatpush2.msra.mxu0 0.0
    %268 = vmatprep.subr.mxu0 0.0
    %269 = vmatpush2.msra.mxu0 0.0
    %270 = vmatprep.subr.mxu0 0.0
    %271 = vmatpush2.msra.mxu0 0.0
    %272 = vmatprep.subr.mxu0 0.0
    %273 = vmatpush2.msra.mxu0 0.0
    %274 = vmatprep.subr.mxu0 0.0
    %275 = vmatpush2.msra.mxu0 0.0
    %276 = vmatprep.subr.mxu0 0.0
    %277 = vmatpush2.msra.mxu0 0.0
    %278 = vmatprep.subr.mxu0 0.0
    %279 = vmatpush2.msra.mxu0 0.0
    %280 = vmatprep.subr.mxu0 0.0
    %281 = vmatpush2.msra.mxu0 0.0
    %282 = vmatprep.subr.mxu0 0.0
    %283 = vmatpush2.msra.mxu0 0.0
    %284 = vmatprep.mubr.f32.mxu0 0.0
    %285 = vmatmul.mubr.f32.gmra.mxu0 %v218
    %v286 = vpop.f32.mrf.mxu0
    %v287 = vadd.f32 0.0, %v286
    %v288 = vpop.f32.mrf.mxu0
    %289 = vdwg.mxu0
    %v290 = vadd.f32 %v215, %v287
    %v291 = vxor.u32 %v290, 2147483648
    %v292 = vmul.f32 %v291, 1.442695
    %v293 = vpow.pop %v292
    %v294 = vadd.f32 %v293, 1.0
    %v295 = vrcp.pop %v294
    %v296 = vmul.f32 1.0, %v295
    %v297 = vtanh.pop %v290
    %299 = vrot.lane.b32.xlu0 %v214, 32
    %v300 = vpop.permute.xlu0 %299
    %v302 = vmul.f32 %v296, %v300
    %304 = vrot.lane.b32.xlu0 %v297, 64
    %v305 = vpop.permute.xlu0 %304
    %v307 = vmul.f32 %v296, %v305
    %309 = vrot.lane.b32.xlu0 %v307, 32
    %v310 = vpop.permute.xlu0 %309
    %v312 = vadd.f32 %v302, %v310
    %v313 = vtanh.pop %v312
    %315 = vrot.lane.b32.xlu0 %v313, 64
    %v316 = vpop.permute.xlu0 %315
    %v318 = vmul.f32 %v296, %v316
    %320 = vrot.lane.b32.xlu0 %v318, 32
    %v321 = vpop.permute.xlu0 %320
    %323 = vst.msk [vmem:[#allocation3] sm:$0xff] %vm216, %v321
    %s324 = scalar_lea.vmem [#allocation2], 8
    %v325 = vld [vmem:[%s324] sm:$0xff]
    %v326 = vsel %vm216, %v321, 0
    %328 = vmatprep.subr.mxu0 0.0
    %329 = vmatpush1.msra.mxu0 0.0
    %330 = vmatprep.subr.mxu0 0.0
    %331 = vmatpush1.msra.mxu0 0.0
    %332 = vmatprep.subr.mxu0 0.0
    %333 = vmatpush1.msra.mxu0 0.0
    %334 = vmatprep.subr.mxu0 0.0
    %335 = vmatpush1.msra.mxu0 0.0
    %336 = vmatprep.subr.mxu0 0.0
    %337 = vmatpush1.msra.mxu0 0.0
    %338 = vmatprep.subr.mxu0 0.0
    %339 = vmatpush1.msra.mxu0 0.0
    %340 = vmatprep.subr.mxu0 0.0
    %341 = vmatpush1.msra.mxu0 0.0
    %342 = vmatprep.subr.mxu0 0.0
    %343 = vmatpush1.msra.mxu0 0.0
    %344 = vmatprep.subr.mxu0 0.0
    %345 = vmatpush1.msra.mxu0 0.0
    %346 = vmatprep.subr.mxu0 0.0
    %347 = vmatpush1.msra.mxu0 0.0
    %348 = vmatprep.subr.mxu0 0.0
    %349 = vmatpush1.msra.mxu0 0.0
    %350 = vmatprep.subr.mxu0 0.0
    %351 = vmatpush1.msra.mxu0 0.0
    %352 = vmatprep.subr.mxu0 0.0
    %353 = vmatpush1.msra.mxu0 %v212
    %354 = vmatprep.subr.mxu0 0.0
    %355 = vmatpush1.msra.mxu0 %v211
    %356 = vmatprep.subr.mxu0 0.0
    %357 = vmatpush1.msra.mxu0 %v210
    %358 = vmatprep.subr.mxu0 0.0
    %359 = vmatpush1.msra.mxu0 %v209
    %360 = vmatprep.subr.mxu0 0.0
    %361 = vmatpush2.msra.mxu0 0.0
    %362 = vmatprep.subr.mxu0 0.0
    %363 = vmatpush2.msra.mxu0 0.0
    %364 = vmatprep.subr.mxu0 0.0
    %365 = vmatpush2.msra.mxu0 0.0
    %366 = vmatprep.subr.mxu0 0.0
    %367 = vmatpush2.msra.mxu0 0.0
    %368 = vmatprep.subr.mxu0 0.0
    %369 = vmatpush2.msra.mxu0 0.0
    %370 = vmatprep.subr.mxu0 0.0
    %371 = vmatpush2.msra.mxu0 0.0
    %372 = vmatprep.subr.mxu0 0.0
    %373 = vmatpush2.msra.mxu0 0.0
    %374 = vmatprep.subr.mxu0 0.0
    %375 = vmatpush2.msra.mxu0 0.0
    %376 = vmatprep.subr.mxu0 0.0
    %377 = vmatpush2.msra.mxu0 0.0
    %378 = vmatprep.subr.mxu0 0.0
    %379 = vmatpush2.msra.mxu0 0.0
    %380 = vmatprep.subr.mxu0 0.0
    %381 = vmatpush2.msra.mxu0 0.0
    %382 = vmatprep.subr.mxu0 0.0
    %383 = vmatpush2.msra.mxu0 0.0
    %384 = vmatprep.subr.mxu0 0.0
    %385 = vmatpush2.msra.mxu0 0.0
    %386 = vmatprep.subr.mxu0 0.0
    %387 = vmatpush2.msra.mxu0 0.0
    %388 = vmatprep.subr.mxu0 0.0
    %389 = vmatpush2.msra.mxu0 0.0
    %390 = vmatprep.subr.mxu0 0.0
    %391 = vmatpush2.msra.mxu0 0.0
    %392 = vmatprep.mubr.f32.mxu0 0.0
    %393 = vmatmul.mubr.f32.gmra.mxu0 %v326
    %v394 = vpop.f32.mrf.mxu0
    %v395 = vadd.f32 0.0, %v394
    %v396 = vpop.f32.mrf.mxu0
    %397 = vdwg.mxu0
    %v398 = vadd.f32 %v325, %v395
    %v399 = vxor.u32 %v398, 2147483648
    %v400 = vmul.f32 %v399, 1.442695
    %v401 = vpow.pop %v400
    %v402 = vadd.f32 %v401, 1.0
    %v403 = vrcp.pop %v402
    %v404 = vmul.f32 1.0, %v403
    %v405 = vtanh.pop %v398
    %v406 = vmul.f32 %v404, %v312
    %408 = vrot.lane.b32.xlu0 %v405, 64
    %v409 = vpop.permute.xlu0 %408
    %v411 = vmul.f32 %v404, %v409
    %413 = vrot.lane.b32.xlu0 %v411, 32
    %v414 = vpop.permute.xlu0 %413
    %v416 = vadd.f32 %v406, %v414
    %v417 = vtanh.pop %v416
    %419 = vrot.lane.b32.xlu0 %v417, 64
    %v420 = vpop.permute.xlu0 %419
    %v422 = vmul.f32 %v404, %v420
    %424 = vrot.lane.b32.xlu0 %v422, 32
    %v425 = vpop.permute.xlu0 %424
    %s427 = scalar_lea.vmem [#allocation3], 8
    %428 = vst.msk [vmem:[%s427] sm:$0xff] %vm216, %v425
    %s429 = scalar_lea.vmem [#allocation2], 16
    %v430 = vld [vmem:[%s429] sm:$0xff]
    %v431 = vsel %vm216, %v425, 0
    %433 = vmatprep.subr.mxu0 0.0
    %434 = vmatpush1.msra.mxu0 0.0
    %435 = vmatprep.subr.mxu0 0.0
    %436 = vmatpush1.msra.mxu0 0.0
    %437 = vmatprep.subr.mxu0 0.0
    %438 = vmatpush1.msra.mxu0 0.0
    %439 = vmatprep.subr.mxu0 0.0
    %440 = vmatpush1.msra.mxu0 0.0
    %441 = vmatprep.subr.mxu0 0.0
    %442 = vmatpush1.msra.mxu0 0.0
    %443 = vmatprep.subr.mxu0 0.0
    %444 = vmatpush1.msra.mxu0 0.0
    %445 = vmatprep.subr.mxu0 0.0
    %446 = vmatpush1.msra.mxu0 0.0
    %447 = vmatprep.subr.mxu0 0.0
    %448 = vmatpush1.msra.mxu0 0.0
    %449 = vmatprep.subr.mxu0 0.0
    %450 = vmatpush1.msra.mxu0 0.0
    %451 = vmatprep.subr.mxu0 0.0
    %452 = vmatpush1.msra.mxu0 0.0
    %453 = vmatprep.subr.mxu0 0.0
    %454 = vmatpush1.msra.mxu0 0.0
    %455 = vmatprep.subr.mxu0 0.0
    %456 = vmatpush1.msra.mxu0 0.0
    %457 = vmatprep.subr.mxu0 0.0
    %458 = vmatpush1.msra.mxu0 %v212
    %459 = vmatprep.subr.mxu0 0.0
    %460 = vmatpush1.msra.mxu0 %v211
    %461 = vmatprep.subr.mxu0 0.0
    %462 = vmatpush1.msra.mxu0 %v210
    %463 = vmatprep.subr.mxu0 0.0
    %464 = vmatpush1.msra.mxu0 %v209
    %465 = vmatprep.subr.mxu0 0.0
    %466 = vmatpush2.msra.mxu0 0.0
    %467 = vmatprep.subr.mxu0 0.0
    %468 = vmatpush2.msra.mxu0 0.0
    %469 = vmatprep.subr.mxu0 0.0
    %470 = vmatpush2.msra.mxu0 0.0
    %471 = vmatprep.subr.mxu0 0.0
    %472 = vmatpush2.msra.mxu0 0.0
    %473 = vmatprep.subr.mxu0 0.0
    %474 = vmatpush2.msra.mxu0 0.0
    %475 = vmatprep.subr.mxu0 0.0
    %476 = vmatpush2.msra.mxu0 0.0
    %477 = vmatprep.subr.mxu0 0.0
    %478 = vmatpush2.msra.mxu0 0.0
    %479 = vmatprep.subr.mxu0 0.0
    %480 = vmatpush2.msra.mxu0 0.0
    %481 = vmatprep.subr.mxu0 0.0
    %482 = vmatpush2.msra.mxu0 0.0
    %483 = vmatprep.subr.mxu0 0.0
    %484 = vmatpush2.msra.mxu0 0.0
    %485 = vmatprep.subr.mxu0 0.0
    %486 = vmatpush2.msra.mxu0 0.0
    %487 = vmatprep.subr.mxu0 0.0
    %488 = vmatpush2.msra.mxu0 0.0
    %489 = vmatprep.subr.mxu0 0.0
    %490 = vmatpush2.msra.mxu0 0.0
    %491 = vmatprep.subr.mxu0 0.0
    %492 = vmatpush2.msra.mxu0 0.0
    %493 = vmatprep.subr.mxu0 0.0
    %494 = vmatpush2.msra.mxu0 0.0
    %495 = vmatprep.subr.mxu0 0.0
    %496 = vmatpush2.msra.mxu0 0.0
    %497 = vmatprep.mubr.f32.mxu0 0.0
    %498 = vmatmul.mubr.f32.gmra.mxu0 %v431
    %v499 = vpop.f32.mrf.mxu0
    %v500 = vadd.f32 0.0, %v499
    %v501 = vpop.f32.mrf.mxu0
    %502 = vdwg.mxu0
    %v503 = vadd.f32 %v430, %v500
    %v504 = vxor.u32 %v503, 2147483648
    %v505 = vmul.f32 %v504, 1.442695
    %v506 = vpow.pop %v505
    %v507 = vadd.f32 %v506, 1.0
    %v508 = vrcp.pop %v507
    %v509 = vmul.f32 1.0, %v508
    %v510 = vtanh.pop %v503
    %v511 = vmul.f32 %v509, %v416
    %513 = vrot.lane.b32.xlu0 %v510, 64
    %v514 = vpop.permute.xlu0 %513
    %v516 = vmul.f32 %v509, %v514
    %518 = vrot.lane.b32.xlu0 %v516, 32
    %v519 = vpop.permute.xlu0 %518
    %v521 = vadd.f32 %v511, %v519
    %v522 = vtanh.pop %v521
    %524 = vrot.lane.b32.xlu0 %v522, 64
    %v525 = vpop.permute.xlu0 %524
    %v527 = vmul.f32 %v509, %v525
    %529 = vrot.lane.b32.xlu0 %v527, 32
    %v530 = vpop.permute.xlu0 %529
    %s532 = scalar_lea.vmem [#allocation3], 16
    %533 = vst.msk [vmem:[%s532] sm:$0xff] %vm216, %v530
    %s534 = scalar_lea.vmem [#allocation2], 24
    %v535 = vld [vmem:[%s534] sm:$0xff]
    %v536 = vsel %vm216, %v530, 0
    %538 = vmatprep.subr.mxu0 0.0
    %539 = vmatpush1.msra.mxu0 0.0
    %540 = vmatprep.subr.mxu0 0.0
    %541 = vmatpush1.msra.mxu0 0.0
    %542 = vmatprep.subr.mxu0 0.0
    %543 = vmatpush1.msra.mxu0 0.0
    %544 = vmatprep.subr.mxu0 0.0
    %545 = vmatpush1.msra.mxu0 0.0
    %546 = vmatprep.subr.mxu0 0.0
    %547 = vmatpush1.msra.mxu0 0.0
    %548 = vmatprep.subr.mxu0 0.0
    %549 = vmatpush1.msra.mxu0 0.0
    %550 = vmatprep.subr.mxu0 0.0
    %551 = vmatpush1.msra.mxu0 0.0
    %552 = vmatprep.subr.mxu0 0.0
    %553 = vmatpush1.msra.mxu0 0.0
    %554 = vmatprep.subr.mxu0 0.0
    %555 = vmatpush1.msra.mxu0 0.0
    %556 = vmatprep.subr.mxu0 0.0
    %557 = vmatpush1.msra.mxu0 0.0
    %558 = vmatprep.subr.mxu0 0.0
    %559 = vmatpush1.msra.mxu0 0.0
    %560 = vmatprep.subr.mxu0 0.0
    %561 = vmatpush1.msra.mxu0 0.0
    %562 = vmatprep.subr.mxu0 0.0
    %563 = vmatpush1.msra.mxu0 %v212
    %564 = vmatprep.subr.mxu0 0.0
    %565 = vmatpush1.msra.mxu0 %v211
    %566 = vmatprep.subr.mxu0 0.0
    %567 = vmatpush1.msra.mxu0 %v210
    %568 = vmatprep.subr.mxu0 0.0
    %569 = vmatpush1.msra.mxu0 %v209
    %570 = vmatprep.subr.mxu0 0.0
    %571 = vmatpush2.msra.mxu0 0.0
    %572 = vmatprep.subr.mxu0 0.0
    %573 = vmatpush2.msra.mxu0 0.0
    %574 = vmatprep.subr.mxu0 0.0
    %575 = vmatpush2.msra.mxu0 0.0
    %576 = vmatprep.subr.mxu0 0.0
    %577 = vmatpush2.msra.mxu0 0.0
    %578 = vmatprep.subr.mxu0 0.0
    %579 = vmatpush2.msra.mxu0 0.0
    %580 = vmatprep.subr.mxu0 0.0
    %581 = vmatpush2.msra.mxu0 0.0
    %582 = vmatprep.subr.mxu0 0.0
    %583 = vmatpush2.msra.mxu0 0.0
    %584 = vmatprep.subr.mxu0 0.0
    %585 = vmatpush2.msra.mxu0 0.0
    %586 = vmatprep.subr.mxu0 0.0
    %587 = vmatpush2.msra.mxu0 0.0
    %588 = vmatprep.subr.mxu0 0.0
    %589 = vmatpush2.msra.mxu0 0.0
    %590 = vmatprep.subr.mxu0 0.0
    %591 = vmatpush2.msra.mxu0 0.0
    %592 = vmatprep.subr.mxu0 0.0
    %593 = vmatpush2.msra.mxu0 0.0
    %594 = vmatprep.subr.mxu0 0.0
    %595 = vmatpush2.msra.mxu0 0.0
    %596 = vmatprep.subr.mxu0 0.0
    %597 = vmatpush2.msra.mxu0 0.0
    %598 = vmatprep.subr.mxu0 0.0
    %599 = vmatpush2.msra.mxu0 0.0
    %600 = vmatprep.subr.mxu0 0.0
    %601 = vmatpush2.msra.mxu0 0.0
    %602 = vmatprep.mubr.f32.mxu0 0.0
    %603 = vmatmul.mubr.f32.gmra.mxu0 %v536
    %v604 = vpop.f32.mrf.mxu0
    %v605 = vadd.f32 0.0, %v604
    %v606 = vpop.f32.mrf.mxu0
    %607 = vdwg.mxu0
    %v608 = vadd.f32 %v535, %v605
    %v609 = vxor.u32 %v608, 2147483648
    %v610 = vmul.f32 %v609, 1.442695
    %v611 = vpow.pop %v610
    %v612 = vadd.f32 %v611, 1.0
    %v613 = vrcp.pop %v612
    %v614 = vmul.f32 1.0, %v613
    %v615 = vtanh.pop %v608
    %v616 = vmul.f32 %v614, %v521
    %618 = vrot.lane.b32.xlu0 %v615, 64
    %v619 = vpop.permute.xlu0 %618
    %v621 = vmul.f32 %v614, %v619
    %623 = vrot.lane.b32.xlu0 %v621, 32
    %v624 = vpop.permute.xlu0 %623
    %v626 = vadd.f32 %v616, %v624
    %v627 = vtanh.pop %v626
    %629 = vrot.lane.b32.xlu0 %v627, 64
    %v630 = vpop.permute.xlu0 %629
    %v632 = vmul.f32 %v614, %v630
    %634 = vrot.lane.b32.xlu0 %v632, 32
    %v635 = vpop.permute.xlu0 %634
    %s637 = scalar_lea.vmem [#allocation3], 24
    %638 = vst.msk [vmem:[%s637] sm:$0xff] %vm216, %v635
    %s639 = scalar_lea.vmem [#allocation2], 32
    %v640 = vld [vmem:[%s639] sm:$0xff]
    %v641 = vsel %vm216, %v635, 0
    %643 = vmatprep.subr.mxu0 0.0
    %644 = vmatpush1.msra.mxu0 0.0
    %645 = vmatprep.subr.mxu0 0.0
    %646 = vmatpush1.msra.mxu0 0.0
    %647 = vmatprep.subr.mxu0 0.0
    %648 = vmatpush1.msra.mxu0 0.0
    %649 = vmatprep.subr.mxu0 0.0
    %650 = vmatpush1.msra.mxu0 0.0
    %651 = vmatprep.subr.mxu0 0.0
    %652 = vmatpush1.msra.mxu0 0.0
    %653 = vmatprep.subr.mxu0 0.0
    %654 = vmatpush1.msra.mxu0 0.0
    %655 = vmatprep.subr.mxu0 0.0
    %656 = vmatpush1.msra.mxu0 0.0
    %657 = vmatprep.subr.mxu0 0.0
    %658 = vmatpush1.msra.mxu0 0.0
    %659 = vmatprep.subr.mxu0 0.0
    %660 = vmatpush1.msra.mxu0 0.0
    %661 = vmatprep.subr.mxu0 0.0
    %662 = vmatpush1.msra.mxu0 0.0
    %663 = vmatprep.subr.mxu0 0.0
    %664 = vmatpush1.msra.mxu0 0.0
    %665 = vmatprep.subr.mxu0 0.0
    %666 = vmatpush1.msra.mxu0 0.0
    %667 = vmatprep.subr.mxu0 0.0
    %668 = vmatpush1.msra.mxu0 %v212
    %669 = vmatprep.subr.mxu0 0.0
    %670 = vmatpush1.msra.mxu0 %v211
    %671 = vmatprep.subr.mxu0 0.0
    %672 = vmatpush1.msra.mxu0 %v210
    %673 = vmatprep.subr.mxu0 0.0
    %674 = vmatpush1.msra.mxu0 %v209
    %675 = vmatprep.subr.mxu0 0.0
    %676 = vmatpush2.msra.mxu0 0.0
    %677 = vmatprep.subr.mxu0 0.0
    %678 = vmatpush2.msra.mxu0 0.0
    %679 = vmatprep.subr.mxu0 0.0
    %680 = vmatpush2.msra.mxu0 0.0
    %681 = vmatprep.subr.mxu0 0.0
    %682 = vmatpush2.msra.mxu0 0.0
    %683 = vmatprep.subr.mxu0 0.0
    %684 = vmatpush2.msra.mxu0 0.0
    %685 = vmatprep.subr.mxu0 0.0
    %686 = vmatpush2.msra.mxu0 0.0
    %687 = vmatprep.subr.mxu0 0.0
    %688 = vmatpush2.msra.mxu0 0.0
    %689 = vmatprep.subr.mxu0 0.0
    %690 = vmatpush2.msra.mxu0 0.0
    %691 = vmatprep.subr.mxu0 0.0
    %692 = vmatpush2.msra.mxu0 0.0
    %693 = vmatprep.subr.mxu0 0.0
    %694 = vmatpush2.msra.mxu0 0.0
    %695 = vmatprep.subr.mxu0 0.0
    %696 = vmatpush2.msra.mxu0 0.0
    %697 = vmatprep.subr.mxu0 0.0
    %698 = vmatpush2.msra.mxu0 0.0
    %699 = vmatprep.subr.mxu0 0.0
    %700 = vmatpush2.msra.mxu0 0.0
    %701 = vmatprep.subr.mxu0 0.0
    %702 = vmatpush2.msra.mxu0 0.0
    %703 = vmatprep.subr.mxu0 0.0
    %704 = vmatpush2.msra.mxu0 0.0
    %705 = vmatprep.subr.mxu0 0.0
    %706 = vmatpush2.msra.mxu0 0.0
    %707 = vmatprep.mubr.f32.mxu0 0.0
    %708 = vmatmul.mubr.f32.gmra.mxu0 %v641
    %v709 = vpop.f32.mrf.mxu0
    %v710 = vadd.f32 0.0, %v709
    %v711 = vpop.f32.mrf.mxu0
    %712 = vdwg.mxu0
    %v713 = vadd.f32 %v640, %v710
    %v714 = vxor.u32 %v713, 2147483648
    %v715 = vmul.f32 %v714, 1.442695
    %v716 = vpow.pop %v715
    %v717 = vadd.f32 %v716, 1.0
    %v718 = vrcp.pop %v717
    %v719 = vmul.f32 1.0, %v718
    %v720 = vtanh.pop %v713
    %v721 = vmul.f32 %v719, %v626
    %723 = vrot.lane.b32.xlu0 %v720, 64
    %v724 = vpop.permute.xlu0 %723
    %v726 = vmul.f32 %v719, %v724
    %728 = vrot.lane.b32.xlu0 %v726, 32
    %v729 = vpop.permute.xlu0 %728
    %v731 = vadd.f32 %v721, %v729
    %v732 = vtanh.pop %v731
    %734 = vrot.lane.b32.xlu0 %v732, 64
    %v735 = vpop.permute.xlu0 %734
    %v737 = vmul.f32 %v719, %v735
    %739 = vrot.lane.b32.xlu0 %v737, 32
    %v740 = vpop.permute.xlu0 %739
    %s742 = scalar_lea.vmem [#allocation3], 32
    %743 = vst.msk [vmem:[%s742] sm:$0xff] %vm216, %v740
    %s744 = scalar_lea.vmem [#allocation2], 40
    %v745 = vld [vmem:[%s744] sm:$0xff]
    %v746 = vsel %vm216, %v740, 0
    %748 = vmatprep.subr.mxu0 0.0
    %749 = vmatpush1.msra.mxu0 0.0
    %750 = vmatprep.subr.mxu0 0.0
    %751 = vmatpush1.msra.mxu0 0.0
    %752 = vmatprep.subr.mxu0 0.0
    %753 = vmatpush1.msra.mxu0 0.0
    %754 = vmatprep.subr.mxu0 0.0
    %755 = vmatpush1.msra.mxu0 0.0
    %756 = vmatprep.subr.mxu0 0.0
    %757 = vmatpush1.msra.mxu0 0.0
    %758 = vmatprep.subr.mxu0 0.0
    %759 = vmatpush1.msra.mxu0 0.0
    %760 = vmatprep.subr.mxu0 0.0
    %761 = vmatpush1.msra.mxu0 0.0
    %762 = vmatprep.subr.mxu0 0.0
    %763 = vmatpush1.msra.mxu0 0.0
    %764 = vmatprep.subr.mxu0 0.0
    %765 = vmatpush1.msra.mxu0 0.0
    %766 = vmatprep.subr.mxu0 0.0
    %767 = vmatpush1.msra.mxu0 0.0
    %768 = vmatprep.subr.mxu0 0.0
    %769 = vmatpush1.msra.mxu0 0.0
    %770 = vmatprep.subr.mxu0 0.0
    %771 = vmatpush1.msra.mxu0 0.0
    %772 = vmatprep.subr.mxu0 0.0
    %773 = vmatpush1.msra.mxu0 %v212
    %774 = vmatprep.subr.mxu0 0.0
    %775 = vmatpush1.msra.mxu0 %v211
    %776 = vmatprep.subr.mxu0 0.0
    %777 = vmatpush1.msra.mxu0 %v210
    %778 = vmatprep.subr.mxu0 0.0
    %779 = vmatpush1.msra.mxu0 %v209
    %780 = vmatprep.subr.mxu0 0.0
    %781 = vmatpush2.msra.mxu0 0.0
    %782 = vmatprep.subr.mxu0 0.0
    %783 = vmatpush2.msra.mxu0 0.0
    %784 = vmatprep.subr.mxu0 0.0
    %785 = vmatpush2.msra.mxu0 0.0
    %786 = vmatprep.subr.mxu0 0.0
    %787 = vmatpush2.msra.mxu0 0.0
    %788 = vmatprep.subr.mxu0 0.0
    %789 = vmatpush2.msra.mxu0 0.0
    %790 = vmatprep.subr.mxu0 0.0
    %791 = vmatpush2.msra.mxu0 0.0
    %792 = vmatprep.subr.mxu0 0.0
    %793 = vmatpush2.msra.mxu0 0.0
    %794 = vmatprep.subr.mxu0 0.0
    %795 = vmatpush2.msra.mxu0 0.0
    %796 = vmatprep.subr.mxu0 0.0
    %797 = vmatpush2.msra.mxu0 0.0
    %798 = vmatprep.subr.mxu0 0.0
    %799 = vmatpush2.msra.mxu0 0.0
    %800 = vmatprep.subr.mxu0 0.0
    %801 = vmatpush2.msra.mxu0 0.0
    %802 = vmatprep.subr.mxu0 0.0
    %803 = vmatpush2.msra.mxu0 0.0
    %804 = vmatprep.subr.mxu0 0.0
    %805 = vmatpush2.msra.mxu0 0.0
    %806 = vmatprep.subr.mxu0 0.0
    %807 = vmatpush2.msra.mxu0 0.0
    %808 = vmatprep.subr.mxu0 0.0
    %809 = vmatpush2.msra.mxu0 0.0
    %810 = vmatprep.subr.mxu0 0.0
    %811 = vmatpush2.msra.mxu0 0.0
    %812 = vmatprep.mubr.f32.mxu0 0.0
    %813 = vmatmul.mubr.f32.gmra.mxu0 %v746
    %v814 = vpop.f32.mrf.mxu0
    %v815 = vadd.f32 0.0, %v814
    %v816 = vpop.f32.mrf.mxu0
    %817 = vdwg.mxu0
    %v818 = vadd.f32 %v745, %v815
    %v819 = vxor.u32 %v818, 2147483648
    %v820 = vmul.f32 %v819, 1.442695
    %v821 = vpow.pop %v820
    %v822 = vadd.f32 %v821, 1.0
    %v823 = vrcp.pop %v822
    %v824 = vmul.f32 1.0, %v823
    %v825 = vtanh.pop %v818
    %v826 = vmul.f32 %v824, %v731
    %828 = vrot.lane.b32.xlu0 %v825, 64
    %v829 = vpop.permute.xlu0 %828
    %v831 = vmul.f32 %v824, %v829
    %833 = vrot.lane.b32.xlu0 %v831, 32
    %v834 = vpop.permute.xlu0 %833
    %v836 = vadd.f32 %v826, %v834
    %v837 = vtanh.pop %v836
    %839 = vrot.lane.b32.xlu0 %v837, 64
    %v840 = vpop.permute.xlu0 %839
    %v842 = vmul.f32 %v824, %v840
    %844 = vrot.lane.b32.xlu0 %v842, 32
    %v845 = vpop.permute.xlu0 %844
    %s847 = scalar_lea.vmem [#allocation3], 40
    %848 = vst.msk [vmem:[%s847] sm:$0xff] %vm216, %v845
    %s849 = scalar_lea.vmem [#allocation2], 48
    %v850 = vld [vmem:[%s849] sm:$0xff]
    %v851 = vsel %vm216, %v845, 0
    %853 = vmatprep.subr.mxu0 0.0
    %854 = vmatpush1.msra.mxu0 0.0
    %855 = vmatprep.subr.mxu0 0.0
    %856 = vmatpush1.msra.mxu0 0.0
    %857 = vmatprep.subr.mxu0 0.0
    %858 = vmatpush1.msra.mxu0 0.0
    %859 = vmatprep.subr.mxu0 0.0
    %860 = vmatpush1.msra.mxu0 0.0
    %861 = vmatprep.subr.mxu0 0.0
    %862 = vmatpush1.msra.mxu0 0.0
    %863 = vmatprep.subr.mxu0 0.0
    %864 = vmatpush1.msra.mxu0 0.0
    %865 = vmatprep.subr.mxu0 0.0
    %866 = vmatpush1.msra.mxu0 0.0
    %867 = vmatprep.subr.mxu0 0.0
    %868 = vmatpush1.msra.mxu0 0.0
    %869 = vmatprep.subr.mxu0 0.0
    %870 = vmatpush1.msra.mxu0 0.0
    %871 = vmatprep.subr.mxu0 0.0
    %872 = vmatpush1.msra.mxu0 0.0
    %873 = vmatprep.subr.mxu0 0.0
    %874 = vmatpush1.msra.mxu0 0.0
    %875 = vmatprep.subr.mxu0 0.0
    %876 = vmatpush1.msra.mxu0 0.0
    %877 = vmatprep.subr.mxu0 0.0
    %878 = vmatpush1.msra.mxu0 %v212
    %879 = vmatprep.subr.mxu0 0.0
    %880 = vmatpush1.msra.mxu0 %v211
    %881 = vmatprep.subr.mxu0 0.0
    %882 = vmatpush1.msra.mxu0 %v210
    %883 = vmatprep.subr.mxu0 0.0
    %884 = vmatpush1.msra.mxu0 %v209
    %885 = vmatprep.subr.mxu0 0.0
    %886 = vmatpush2.msra.mxu0 0.0
    %887 = vmatprep.subr.mxu0 0.0
    %888 = vmatpush2.msra.mxu0 0.0
    %889 = vmatprep.subr.mxu0 0.0
    %890 = vmatpush2.msra.mxu0 0.0
    %891 = vmatprep.subr.mxu0 0.0
    %892 = vmatpush2.msra.mxu0 0.0
    %893 = vmatprep.subr.mxu0 0.0
    %894 = vmatpush2.msra.mxu0 0.0
    %895 = vmatprep.subr.mxu0 0.0
    %896 = vmatpush2.msra.mxu0 0.0
    %897 = vmatprep.subr.mxu0 0.0
    %898 = vmatpush2.msra.mxu0 0.0
    %899 = vmatprep.subr.mxu0 0.0
    %900 = vmatpush2.msra.mxu0 0.0
    %901 = vmatprep.subr.mxu0 0.0
    %902 = vmatpush2.msra.mxu0 0.0
    %903 = vmatprep.subr.mxu0 0.0
    %904 = vmatpush2.msra.mxu0 0.0
    %905 = vmatprep.subr.mxu0 0.0
    %906 = vmatpush2.msra.mxu0 0.0
    %907 = vmatprep.subr.mxu0 0.0
    %908 = vmatpush2.msra.mxu0 0.0
    %909 = vmatprep.subr.mxu0 0.0
    %910 = vmatpush2.msra.mxu0 0.0
    %911 = vmatprep.subr.mxu0 0.0
    %912 = vmatpush2.msra.mxu0 0.0
    %913 = vmatprep.subr.mxu0 0.0
    %914 = vmatpush2.msra.mxu0 0.0
    %915 = vmatprep.subr.mxu0 0.0
    %916 = vmatpush2.msra.mxu0 0.0
    %917 = vmatprep.mubr.f32.mxu0 0.0
    %918 = vmatmul.mubr.f32.gmra.mxu0 %v851
    %v919 = vpop.f32.mrf.mxu0
    %v920 = vadd.f32 0.0, %v919
    %v921 = vpop.f32.mrf.mxu0
    %922 = vdwg.mxu0
    %v923 = vadd.f32 %v850, %v920
    %v924 = vxor.u32 %v923, 2147483648
    %v925 = vmul.f32 %v924, 1.442695
    %v926 = vpow.pop %v925
    %v927 = vadd.f32 %v926, 1.0
    %v928 = vrcp.pop %v927
    %v929 = vmul.f32 1.0, %v928
    %v930 = vtanh.pop %v923
    %v931 = vmul.f32 %v929, %v836
    %933 = vrot.lane.b32.xlu0 %v930, 64
    %v934 = vpop.permute.xlu0 %933
    %v936 = vmul.f32 %v929, %v934
    %938 = vrot.lane.b32.xlu0 %v936, 32
    %v939 = vpop.permute.xlu0 %938
    %v941 = vadd.f32 %v931, %v939
    %v942 = vtanh.pop %v941
    %944 = vrot.lane.b32.xlu0 %v942, 64
    %v945 = vpop.permute.xlu0 %944
    %v947 = vmul.f32 %v929, %v945
    %949 = vrot.lane.b32.xlu0 %v947, 32
    %v950 = vpop.permute.xlu0 %949
    %s952 = scalar_lea.vmem [#allocation3], 48
    %953 = vst.msk [vmem:[%s952] sm:$0xff] %vm216, %v950
    %s954 = scalar_lea.vmem [#allocation2], 56
    %v955 = vld [vmem:[%s954] sm:$0xff]
    %v956 = vsel %vm216, %v950, 0
    %958 = vmatprep.subr.mxu0 0.0
    %959 = vmatpush1.msra.mxu0 0.0
    %960 = vmatprep.subr.mxu0 0.0
    %961 = vmatpush1.msra.mxu0 0.0
    %962 = vmatprep.subr.mxu0 0.0
    %963 = vmatpush1.msra.mxu0 0.0
    %964 = vmatprep.subr.mxu0 0.0
    %965 = vmatpush1.msra.mxu0 0.0
    %966 = vmatprep.subr.mxu0 0.0
    %967 = vmatpush1.msra.mxu0 0.0
    %968 = vmatprep.subr.mxu0 0.0
    %969 = vmatpush1.msra.mxu0 0.0
    %970 = vmatprep.subr.mxu0 0.0
    %971 = vmatpush1.msra.mxu0 0.0
    %972 = vmatprep.subr.mxu0 0.0
    %973 = vmatpush1.msra.mxu0 0.0
    %974 = vmatprep.subr.mxu0 0.0
    %975 = vmatpush1.msra.mxu0 0.0
    %976 = vmatprep.subr.mxu0 0.0
    %977 = vmatpush1.msra.mxu0 0.0
    %978 = vmatprep.subr.mxu0 0.0
    %979 = vmatpush1.msra.mxu0 0.0
    %980 = vmatprep.subr.mxu0 0.0
    %981 = vmatpush1.msra.mxu0 0.0
    %982 = vmatprep.subr.mxu0 0.0
    %983 = vmatpush1.msra.mxu0 %v212
    %984 = vmatprep.subr.mxu0 0.0
    %985 = vmatpush1.msra.mxu0 %v211
    %986 = vmatprep.subr.mxu0 0.0
    %987 = vmatpush1.msra.mxu0 %v210
    %988 = vmatprep.subr.mxu0 0.0
    %989 = vmatpush1.msra.mxu0 %v209
    %990 = vmatprep.subr.mxu0 0.0
    %991 = vmatpush2.msra.mxu0 0.0
    %992 = vmatprep.subr.mxu0 0.0
    %993 = vmatpush2.msra.mxu0 0.0
    %994 = vmatprep.subr.mxu0 0.0
    %995 = vmatpush2.msra.mxu0 0.0
    %996 = vmatprep.subr.mxu0 0.0
    %997 = vmatpush2.msra.mxu0 0.0
    %998 = vmatprep.subr.mxu0 0.0
    %999 = vmatpush2.msra.mxu0 0.0
    %1000 = vmatprep.subr.mxu0 0.0
    %1001 = vmatpush2.msra.mxu0 0.0
    %1002 = vmatprep.subr.mxu0 0.0
    %1003 = vmatpush2.msra.mxu0 0.0
    %1004 = vmatprep.subr.mxu0 0.0
    %1005 = vmatpush2.msra.mxu0 0.0
    %1006 = vmatprep.subr.mxu0 0.0
    %1007 = vmatpush2.msra.mxu0 0.0
    %1008 = vmatprep.subr.mxu0 0.0
    %1009 = vmatpush2.msra.mxu0 0.0
    %1010 = vmatprep.subr.mxu0 0.0
    %1011 = vmatpush2.msra.mxu0 0.0
    %1012 = vmatprep.subr.mxu0 0.0
    %1013 = vmatpush2.msra.mxu0 0.0
    %1014 = vmatprep.subr.mxu0 0.0
    %1015 = vmatpush2.msra.mxu0 0.0
    %1016 = vmatprep.subr.mxu0 0.0
    %1017 = vmatpush2.msra.mxu0 0.0
    %1018 = vmatprep.subr.mxu0 0.0
    %1019 = vmatpush2.msra.mxu0 0.0
    %1020 = vmatprep.subr.mxu0 0.0
    %1021 = vmatpush2.msra.mxu0 0.0
    %1022 = vmatprep.mubr.f32.mxu0 0.0
    %1023 = vmatmul.mubr.f32.gmra.mxu0 %v956
    %v1024 = vpop.f32.mrf.mxu0
    %v1025 = vadd.f32 0.0, %v1024
    %v1026 = vpop.f32.mrf.mxu0
    %1027 = vdwg.mxu0
    %v1028 = vadd.f32 %v955, %v1025
    %v1029 = vxor.u32 %v1028, 2147483648
    %v1030 = vmul.f32 %v1029, 1.442695
    %v1031 = vpow.pop %v1030
    %v1032 = vadd.f32 %v1031, 1.0
    %v1033 = vrcp.pop %v1032
    %v1034 = vmul.f32 1.0, %v1033
    %v1035 = vtanh.pop %v1028
    %v1036 = vmul.f32 %v1034, %v941
    %1038 = vrot.lane.b32.xlu0 %v1035, 64
    %v1039 = vpop.permute.xlu0 %1038
    %v1041 = vmul.f32 %v1034, %v1039
    %1043 = vrot.lane.b32.xlu0 %v1041, 32
    %v1044 = vpop.permute.xlu0 %1043
    %v1046 = vadd.f32 %v1036, %v1044
    %v1047 = vtanh.pop %v1046
    %1049 = vrot.lane.b32.xlu0 %v1047, 64
    %v1050 = vpop.permute.xlu0 %1049
    %v1052 = vmul.f32 %v1034, %v1050
    %1054 = vrot.lane.b32.xlu0 %v1052, 32
    %v1055 = vpop.permute.xlu0 %1054
    %s1057 = scalar_lea.vmem [#allocation3], 56
    %1058 = vst.msk [vmem:[%s1057] sm:$0xff] %vm216, %v1055
    %v1059 = vld [vmem:[#allocation3] sm:$0xff]
    %v1060 = vld [vmem:[#allocation3 + $0x8] sm:$0xff]
    %v1061 = vld [vmem:[#allocation3 + $0x10] sm:$0xff]
    %v1062 = vld [vmem:[#allocation3 + $0x18] sm:$0xff]
    %v1063 = vld [vmem:[#allocation3 + $0x20] sm:$0xff]
    %v1064 = vld [vmem:[#allocation3 + $0x28] sm:$0xff]
    %v1065 = vld [vmem:[#allocation3 + $0x30] sm:$0xff]
    %v1066 = vld [vmem:[#allocation3 + $0x38] sm:$0xff]
    %v1067 = vld [vmem:[%s6] sm:$0xff]
    %v1068 = vld [vmem:[%s6 + $0x8] sm:$0xff]
    %v1069 = vld [vmem:[%s6 + $0x10] sm:$0xff]
    %v1070 = vld [vmem:[%s6 + $0x18] sm:$0xff]
    %v1071 = vld [vmem:[%s7] sm:$0x1]
    %v1073 = vlaneseq
    %v1074 = vshrl.u32 %v1073, 7
    %v1075 = vsub.s32 0, %v1074
    %v1076 = vrot.slane %v1071, %v1075
    %v1079 = vsel %vm216, %v1059, 0
    %v1082 = vsel %vm216, %v1060, 0
    %v1085 = vsel %vm216, %v1061, 0
    %v1088 = vsel %vm216, %v1062, 0
    %v1091 = vsel %vm216, %v1063, 0
    %v1094 = vsel %vm216, %v1064, 0
    %v1097 = vsel %vm216, %v1065, 0
    %v1100 = vsel %vm216, %v1066, 0
    %1102 = vmatprep.subr.mxu0 0.0
    %1103 = vmatpush1.msra.mxu0 0.0
    %1104 = vmatprep.subr.mxu0 0.0
    %1105 = vmatpush1.msra.mxu0 0.0
    %1106 = vmatprep.subr.mxu0 0.0
    %1107 = vmatpush1.msra.mxu0 0.0
    %1108 = vmatprep.subr.mxu0 0.0
    %1109 = vmatpush1.msra.mxu0 0.0
    %1110 = vmatprep.subr.mxu0 0.0
    %1111 = vmatpush1.msra.mxu0 0.0
    %1112 = vmatprep.subr.mxu0 0.0
    %1113 = vmatpush1.msra.mxu0 0.0
    %1114 = vmatprep.subr.mxu0 0.0
    %1115 = vmatpush1.msra.mxu0 0.0
    %1116 = vmatprep.subr.mxu0 0.0
    %1117 = vmatpush1.msra.mxu0 0.0
    %1118 = vmatprep.subr.mxu0 0.0
    %1119 = vmatpush1.msra.mxu0 0.0
    %1120 = vmatprep.subr.mxu0 0.0
    %1121 = vmatpush1.msra.mxu0 0.0
    %1122 = vmatprep.subr.mxu0 0.0
    %1123 = vmatpush1.msra.mxu0 0.0
    %1124 = vmatprep.subr.mxu0 0.0
    %1125 = vmatpush1.msra.mxu0 0.0
    %1126 = vmatprep.subr.mxu0 0.0
    %1127 = vmatpush1.msra.mxu0 %v1070
    %1128 = vmatprep.subr.mxu0 0.0
    %1129 = vmatpush1.msra.mxu0 %v1069
    %1130 = vmatprep.subr.mxu0 0.0
    %1131 = vmatpush1.msra.mxu0 %v1068
    %1132 = vmatprep.subr.mxu0 0.0
    %1133 = vmatpush1.msra.mxu0 %v1067
    %1134 = vmatprep.subr.mxu0 0.0
    %1135 = vmatpush2.msra.mxu0 0.0
    %1136 = vmatprep.subr.mxu0 0.0
    %1137 = vmatpush2.msra.mxu0 0.0
    %1138 = vmatprep.subr.mxu0 0.0
    %1139 = vmatpush2.msra.mxu0 0.0
    %1140 = vmatprep.subr.mxu0 0.0
    %1141 = vmatpush2.msra.mxu0 0.0
    %1142 = vmatprep.subr.mxu0 0.0
    %1143 = vmatpush2.msra.mxu0 0.0
    %1144 = vmatprep.subr.mxu0 0.0
    %1145 = vmatpush2.msra.mxu0 0.0
    %1146 = vmatprep.subr.mxu0 0.0
    %1147 = vmatpush2.msra.mxu0 0.0
    %1148 = vmatprep.subr.mxu0 0.0
    %1149 = vmatpush2.msra.mxu0 0.0
    %1150 = vmatprep.subr.mxu0 0.0
    %1151 = vmatpush2.msra.mxu0 0.0
    %1152 = vmatprep.subr.mxu0 0.0
    %1153 = vmatpush2.msra.mxu0 0.0
    %1154 = vmatprep.subr.mxu0 0.0
    %1155 = vmatpush2.msra.mxu0 0.0
    %1156 = vmatprep.subr.mxu0 0.0
    %1157 = vmatpush2.msra.mxu0 0.0
    %1158 = vmatprep.subr.mxu0 0.0
    %1159 = vmatpush2.msra.mxu0 0.0
    %1160 = vmatprep.subr.mxu0 0.0
    %1161 = vmatpush2.msra.mxu0 0.0
    %1162 = vmatprep.subr.mxu0 0.0
    %1163 = vmatpush2.msra.mxu0 0.0
    %1164 = vmatprep.subr.mxu0 0.0
    %1165 = vmatpush2.msra.mxu0 0.0
    %1166 = vmatprep.mubr.f32.mxu0 0.0
    %1167 = vmatmul.mubr.f32.gmra.mxu0 %v1079
    %v1168 = vpop.f32.mrf.mxu0
    %v1169 = vadd.f32 %v1076, %v1168
    %v1170 = vpop.f32.mrf.mxu0
    %1171 = vmatprep.mubr.f32.mxu0 0.0
    %1172 = vmatmul.mubr.f32.gmra.mxu0 %v1082
    %v1173 = vpop.f32.mrf.mxu0
    %v1174 = vadd.f32 %v1076, %v1173
    %v1175 = vpop.f32.mrf.mxu0
    %1176 = vmatprep.mubr.f32.mxu0 0.0
    %1177 = vmatmul.mubr.f32.gmra.mxu0 %v1085
    %v1178 = vpop.f32.mrf.mxu0
    %v1179 = vadd.f32 %v1076, %v1178
    %v1180 = vpop.f32.mrf.mxu0
    %1181 = vmatprep.mubr.f32.mxu0 0.0
    %1182 = vmatmul.mubr.f32.gmra.mxu0 %v1088
    %v1183 = vpop.f32.mrf.mxu0
    %v1184 = vadd.f32 %v1076, %v1183
    %v1185 = vpop.f32.mrf.mxu0
    %1186 = vmatprep.mubr.f32.mxu0 0.0
    %1187 = vmatmul.mubr.f32.gmra.mxu0 %v1091
    %v1188 = vpop.f32.mrf.mxu0
    %v1189 = vadd.f32 %v1076, %v1188
    %v1190 = vpop.f32.mrf.mxu0
    %1191 = vmatprep.mubr.f32.mxu0 0.0
    %1192 = vmatmul.mubr.f32.gmra.mxu0 %v1094
    %v1193 = vpop.f32.mrf.mxu0
    %v1194 = vadd.f32 %v1076, %v1193
    %v1195 = vpop.f32.mrf.mxu0
    %1196 = vmatprep.mubr.f32.mxu0 0.0
    %1197 = vmatmul.mubr.f32.gmra.mxu0 %v1097
    %v1198 = vpop.f32.mrf.mxu0
    %v1199 = vadd.f32 %v1076, %v1198
    %v1200 = vpop.f32.mrf.mxu0
    %1201 = vmatprep.mubr.f32.mxu0 0.0
    %1202 = vmatmul.mubr.f32.gmra.mxu0 %v1100
    %v1203 = vpop.f32.mrf.mxu0
    %v1204 = vadd.f32 %v1076, %v1203
    %v1205 = vpop.f32.mrf.mxu0
    %1206 = vdwg.mxu0
    %1207 = vst [vmem:[#allocation9] sm:$0xff] %v1169
    %1208 = vst [vmem:[#allocation9 + $0x8] sm:$0xff] %v1174
    %1209 = vst [vmem:[#allocation9 + $0x10] sm:$0xff] %v1179
    %1210 = vst [vmem:[#allocation9 + $0x18] sm:$0xff] %v1184
    %1211 = vst [vmem:[#allocation9 + $0x20] sm:$0xff] %v1189
    %1212 = vst [vmem:[#allocation9 + $0x28] sm:$0xff] %v1194
    %1213 = vst [vmem:[#allocation9 + $0x30] sm:$0xff] %v1199
    %1214 = vst [vmem:[#allocation9 + $0x38] sm:$0xff] %v1204
    // Predicated region
    $region42: #{tpu_custom_call.1} parent=1 // pred_check
      _
    $region43: #{tpu_custom_call.1} parent=1 // pred_check_branch
      %1216 = sbr.rel (0) target = $region45
    $region44: #{tpu_custom_call.1} parent=1 // pred_region
      %s1218 = ssub.s32 1024, 1024
      %1219 = vsyncadd [#allocation6], %s1218
      %s1220 = sshll.u32 [#allocation9], 4
      %s1221 = int_to_ptr.vmem [resolvable:$true] %s1220
      %1226 = dma.vmem_to_hbm [thread:$0]  %s1221, 1024, %s8, [#allocation6], 128, 128, 8
    $region45: #{tpu_custom_call.1} parent=1 // pred_fallthru
      _
    // Predicated region
    $region46: #{tpu_custom_call.1} parent=1 // pred_check
      _
    $region47: #{tpu_custom_call.1} parent=1 // pred_check_branch
      %1228 = sbr.rel (0) target = $region49
    $region48: #{tpu_custom_call.1} parent=1 // pred_region
      %1229 = dma.done [#allocation6], 1024
    $region49: #{tpu_custom_call.1} parent=1 // pred_fallthru
      _
    %1230 = vsyncpa [#allocation5], 1
    %1231 = vsyncpa [#allocation8], 1
    %1232 = vsyncpa [#allocation6], 1

</llo_original>
